<compile_context>
chip_gen: v5e
topology: v5e:2x2
jax: 0.10.0
libtpu: 0.0.40
codegen_flags: <defaults>
</compile_context>

<pallas_src>
import jax
import jax.numpy as jnp
import numpy as np
from jax.experimental import pallas as pl
from jax.experimental.pallas import tpu as pltpu


def _make_fp_kernel(tn, m, c1, c2, mlp):
    num_layers = len(mlp) - 1
    c_cat = c1 + c2

    def kernel(*refs):
        unk_xyz_ref, known_xyz_ref, unkf_ref, knownf_ref = refs[:4]
        layer_refs = refs[4:4 + 2 * num_layers]
        out_ref = refs[4 + 2 * num_layers]
        feat_ref = refs[5 + 2 * num_layers]          # VMEM scratch (c1+c2, tn)

        f32 = jnp.float32
        u = unk_xyz_ref[...]                         # (3, tn)  unknown xyz (tiny)
        k = known_xyz_ref[...]                       # (m, 3)   known xyz

        # Squared-distance expansion terms.
        uu = jnp.sum(u * u, axis=0, keepdims=True)   # (1, tn)
        kk = jnp.sum(k * k, axis=1, keepdims=True)   # (m, 1)

        # cross[j, i] = k_j . u_i  — only a 3-deep contraction, so do it with
        # three rank-1 VPU broadcasts (exact f32, avoids a tiny MXU issue).
        cross = (k[:, 0:1] * u[0:1, :] +
                 k[:, 1:2] * u[1:2, :] +
                 k[:, 2:3] * u[2:3, :])              # (m, tn)

        # Per-column ranking term (adding uu[i] does not change the ordering).
        d = kk - 2.0 * cross                         # (m, tn)

        row = jax.lax.broadcasted_iota(jnp.int32, (m, tn), 0)
        big = f32(1e30)

        # three_nn: 3 argmin passes (ties broken to the lowest index).
        recips = []
        sels = []
        dwork = d
        for _ in range(3):
            dmin = jnp.min(dwork, axis=0, keepdims=True)                 # (1, tn)
            amin = jnp.min(jnp.where(dwork == dmin, row, m), axis=0,
                           keepdims=True)                                # (1, tn)
            sel = row == amin                                            # (m, tn)
            dist = jnp.sqrt(jnp.maximum(dmin + uu, 0.0))                 # (1, tn)
            recips.append(1.0 / (dist + 1e-8))
            sels.append(sel)
            dwork = jnp.where(sel, big, dwork)

        inv_norm = 1.0 / (recips[0] + recips[1] + recips[2])             # (1, tn)

        # Scatter normalized weights onto the selected rows: this turns
        # three_interpolate into a single dense MXU matmul below.
        wsel = (jnp.where(sels[0], recips[0] * inv_norm, 0.0) +
                jnp.where(sels[1], recips[1] * inv_norm, 0.0) +
                jnp.where(sels[2], recips[2] * inv_norm, 0.0))           # (m, tn)

        interp = jnp.dot(knownf_ref[...], wsel,
                         preferred_element_type=f32)                     # (c2, tn)

        # torch.cat([interpolated_feats, unknow_feats], dim=1):
        # two sublane-range stores (c2 is a multiple of 8), no lane relayout.
        feat_ref[0:c2, :] = interp
        feat_ref[c2:c_cat, :] = unkf_ref[...]

        # Shared MLP: 1x1 Conv (W @ x) -> folded eval-mode BN -> ReLU.
        x = feat_ref[...]
        for l in range(num_layers):
            w = layer_refs[2 * l][...]                                   # (co, ci)
            sb = layer_refs[2 * l + 1][...]                              # (co, 2)
            y = jnp.dot(w, x, preferred_element_type=f32)                # (co, tn)
            y = y * sb[:, 0:1] + sb[:, 1:2]
            x = jnp.maximum(y, 0.0)

        out_ref[...] = x.astype(out_ref.dtype)

    return kernel


def _pick_tile(n):
    for tn in (512, 256, 128):
        if n % tn == 0:
            return tn
    return n          # fall back to a single full-width block (still legal)


def pointnet_fp_module(unknown, known, unknow_feats, known_feats, params):
    """Forward pass of PointnetFPModule (eval mode).

    unknown:      (B, n, 3)   xyz of points to propagate to
    known:        (B, m, 3)   xyz of points to propagate from
    unknow_feats: (B, C1, n)
    known_feats:  (B, C2, m)
    returns:      (B, mlp[-1], n)
    """
    B, n, _ = unknown.shape
    m = known.shape[1]
    c1 = unknow_feats.shape[1]
    c2 = known_feats.shape[1]
    mlp = params["mlp"]
    assert mlp[0] == c1 + c2
    c_out = mlp[-1]

    tn = _pick_tile(n)
    n_tiles = n // tn

    # Only the tiny xyz tensor is transposed (3*n floats); the big feature
    # tensors stay channels-first so their lane dim is the point count.
    unknown_t = jnp.transpose(unknown, (0, 2, 1))        # (B, 3, n)

    kernel = _make_fp_kernel(tn, m, c1, c2, mlp)

    in_specs = [
        pl.BlockSpec((None, 3, tn), lambda b, t: (b, 0, t)),    # unknown xyz
        pl.BlockSpec((None, m, 3), lambda b, t: (b, 0, 0)),     # known xyz
        pl.BlockSpec((None, c1, tn), lambda b, t: (b, 0, t)),   # unknow_feats
        pl.BlockSpec((None, c2, m), lambda b, t: (b, 0, 0)),    # known_feats
    ]
    args = [unknown_t, known, unknow_feats, known_feats]
    for w, sb in zip(params["w"], params["sb"]):
        in_specs.append(pl.BlockSpec(w.shape, lambda b, t: (0, 0)))
        in_specs.append(pl.BlockSpec(sb.shape, lambda b, t: (0, 0)))
        args.extend([w, sb])

    grid_spec = pltpu.PrefetchScalarGridSpec(
        num_scalar_prefetch=0,
        grid=(B, n_tiles),
        in_specs=in_specs,
        out_specs=pl.BlockSpec((None, c_out, tn), lambda b, t: (b, 0, t)),
        scratch_shapes=[pltpu.VMEM((c1 + c2, tn), jnp.float32)],
    )

    return pl.pallas_call(
        kernel,
        out_shape=jax.ShapeDtypeStruct((B, c_out, n), jnp.float32),
        grid_spec=grid_spec,
        compiler_params=pltpu.CompilerParams(
            dimension_semantics=("parallel", "parallel")),
    )(*args)


def make_params(key, mlp):
    """Deterministic init. Conv weights stored (out, in); eval-mode BatchNorm
    folded into a per-layer (out, 2) [scale | bias] array."""
    ws, sbs = [], []
    keys = jax.random.split(key, 5 * (len(mlp) - 1))
    for l in range(len(mlp) - 1):
        ci, co = mlp[l], mlp[l + 1]
        kw, kg, kb, km, kv = keys[5 * l:5 * l + 5]
        bound = 1.0 / np.sqrt(ci)
        w = jax.random.uniform(kw, (co, ci), jnp.float32, -bound, bound)
        gamma = 1.0 + 0.1 * jax.random.normal(kg, (co,), jnp.float32)
        beta = 0.1 * jax.random.normal(kb, (co,), jnp.float32)
        mean = 0.1 * jax.random.normal(km, (co,), jnp.float32)
        var = 0.9 + 0.2 * jax.random.uniform(kv, (co,), jnp.float32)
        scale = gamma / jnp.sqrt(var + 1e-5)
        bias = beta - mean * scale
        ws.append(w)
        sbs.append(jnp.stack([scale, bias], axis=1))     # (co, 2)
    return {"mlp": mlp, "w": ws, "sb": sbs}


def reference(unknown, known, unknow_feats, known_feats, params):
    """Pure-JAX reference of the PyTorch forward (eval-mode folded BN)."""
    m = known.shape[1]
    uu = jnp.sum(unknown * unknown, axis=-1)                               # (B, n)
    kk = jnp.sum(known * known, axis=-1)                                   # (B, m)
    cross = jnp.sum(known[:, :, None, :] * unknown[:, None, :, :], -1)     # (B, m, n)
    d = kk[:, :, None] - 2.0 * cross                                       # (B, m, n)

    row = jnp.arange(m, dtype=jnp.int32)[None, :, None]
    recips, sels = [], []
    dwork = d
    for _ in range(3):
        dmin = jnp.min(dwork, axis=1, keepdims=True)
        amin = jnp.min(jnp.where(dwork == dmin, row, m), axis=1, keepdims=True)
        sel = row == amin
        dist = jnp.sqrt(jnp.maximum(dmin + uu[:, None, :], 0.0))
        recips.append(1.0 / (dist + 1e-8))
        sels.append(sel)
        dwork = jnp.where(sel, 1e30, dwork)
    inv_norm = 1.0 / (recips[0] + recips[1] + recips[2])
    wsel = sum(jnp.where(s, r * inv_norm, 0.0) for s, r in zip(sels, recips))

    interp = jnp.einsum('bcm,bmn->bcn', known_feats, wsel,
                        precision=jax.lax.Precision.HIGHEST)
    x = jnp.concatenate([interp, unknow_feats], axis=1)
    for w, sb in zip(params["w"], params["sb"]):
        y = jnp.einsum('oc,bcn->bon', w, x,
                       precision=jax.lax.Precision.HIGHEST)
        y = y * sb[None, :, 0:1] + sb[None, :, 1:2]
        x = jnp.maximum(y, 0.0)
    return x


if __name__ == "__main__":
    B, n, m = 2, 128, 64
    C1, C2 = 16, 32
    mlp = [C1 + C2, 64, 64]

    key = jax.random.PRNGKey(0)
    k1, k2, k3, k4, kp = jax.random.split(key, 5)
    unknown = jax.random.normal(k1, (B, n, 3), jnp.float32)
    known = jax.random.normal(k2, (B, m, 3), jnp.float32)
    unknow_feats = jax.random.normal(k3, (B, C1, n), jnp.float32)
    known_feats = jax.random.normal(k4, (B, C2, m), jnp.float32)
    params = make_params(kp, mlp)

    out = pointnet_fp_module(unknown, known, unknow_feats, known_feats, params)
    out = jax.block_until_ready(out)
    assert out.shape == (B, mlp[-1], n)

    ref = jax.block_until_ready(
        reference(unknown, known, unknow_feats, known_feats, params))
    np.testing.assert_allclose(np.asarray(out), np.asarray(ref),
                               rtol=1e-3, atol=1e-3)
    print("KERNEL_OK")
</pallas_src>

<mosaic_0001>
module attributes {stable_mosaic.version = 11 : i64} {
  func.func @kernel(%arg0: i32, %arg1: i32, %arg2: memref<1x3x128xf32, #tpu.memory_space<vmem>>, %arg3: memref<1x64x3xf32, #tpu.memory_space<vmem>>, %arg4: memref<1x16x128xf32, #tpu.memory_space<vmem>>, %arg5: memref<1x32x64xf32, #tpu.memory_space<vmem>>, %arg6: memref<64x48xf32, #tpu.memory_space<vmem>>, %arg7: memref<64x2xf32, #tpu.memory_space<vmem>>, %arg8: memref<64x64xf32, #tpu.memory_space<vmem>>, %arg9: memref<64x2xf32, #tpu.memory_space<vmem>>, %arg10: memref<1x64x128xf32, #tpu.memory_space<vmem>>, %arg11: memref<48x128xf32, #tpu.memory_space<vmem>>) attributes {dimension_semantics = [#tpu.dimension_semantics<parallel>, #tpu.dimension_semantics<parallel>], iteration_bounds = array<i64: 2, 1>, scalar_prefetch = 0 : i64, scratch_operands = 1 : i64, tpu.core_type = #tpu.core_type<tc>, window_params = [{transform_indices = @transform_0, window_bounds = array<i64: 1, 3, 128>}, {transform_indices = @transform_1, window_bounds = array<i64: 1, 64, 3>}, {transform_indices = @transform_2, window_bounds = array<i64: 1, 16, 128>}, {transform_indices = @transform_3, window_bounds = array<i64: 1, 32, 64>}, {pipeline_mode = #tpu.pipeline_mode<synchronous>, transform_indices = @transform_4, window_bounds = array<i64: 64, 48>}, {pipeline_mode = #tpu.pipeline_mode<synchronous>, transform_indices = @transform_5, window_bounds = array<i64: 64, 2>}, {pipeline_mode = #tpu.pipeline_mode<synchronous>, transform_indices = @transform_6, window_bounds = array<i64: 64, 64>}, {pipeline_mode = #tpu.pipeline_mode<synchronous>, transform_indices = @transform_7, window_bounds = array<i64: 64, 2>}, {transform_indices = @transform_8, window_bounds = array<i64: 1, 64, 128>}]} {
    %c0 = arith.constant 0 : index
    %c0_0 = arith.constant 0 : index
    %c0_1 = arith.constant 0 : index
    %0 = vector.load %arg2[%c0, %c0_0, %c0_1] : memref<1x3x128xf32, #tpu.memory_space<vmem>>, vector<1x3x128xf32>
    %1 = vector.shape_cast %0 : vector<1x3x128xf32> to vector<3x128xf32>
    %c0_2 = arith.constant 0 : index
    %c0_3 = arith.constant 0 : index
    %c0_4 = arith.constant 0 : index
    %2 = vector.load %arg3[%c0_2, %c0_3, %c0_4] : memref<1x64x3xf32, #tpu.memory_space<vmem>>, vector<1x64x3xf32>
    %3 = vector.shape_cast %2 : vector<1x64x3xf32> to vector<64x3xf32>
    %4 = arith.mulf %1, %1 : vector<3x128xf32>
    %cst = arith.constant dense<0.000000e+00> : vector<128xf32>
    %5 = vector.multi_reduction <add>, %4, %cst [0] : vector<3x128xf32> to vector<128xf32>
    %6 = vector.shape_cast %5 : vector<128xf32> to vector<1x128xf32>
    %7 = arith.mulf %3, %3 : vector<64x3xf32>
    %cst_5 = arith.constant dense<0.000000e+00> : vector<64xf32>
    %8 = vector.multi_reduction <add>, %7, %cst_5 [1] : vector<64x3xf32> to vector<64xf32>
    %9 = vector.shape_cast %8 : vector<64xf32> to vector<64x1xf32>
    %10 = vector.extract_strided_slice %3 {offsets = [0, 0], sizes = [64, 1], strides = [1, 1]} : vector<64x3xf32> to vector<64x1xf32>
    %11 = vector.extract_strided_slice %1 {offsets = [0, 0], sizes = [1, 128], strides = [1, 1]} : vector<3x128xf32> to vector<1x128xf32>
    %12 = vector.broadcast %10 : vector<64x1xf32> to vector<64x128xf32>
    %13 = vector.broadcast %11 : vector<1x128xf32> to vector<64x128xf32>
    %14 = arith.mulf %12, %13 : vector<64x128xf32>
    %15 = vector.extract_strided_slice %3 {offsets = [0, 1], sizes = [64, 1], strides = [1, 1]} : vector<64x3xf32> to vector<64x1xf32>
    %16 = vector.extract_strided_slice %1 {offsets = [1, 0], sizes = [1, 128], strides = [1, 1]} : vector<3x128xf32> to vector<1x128xf32>
    %17 = vector.broadcast %15 : vector<64x1xf32> to vector<64x128xf32>
    %18 = vector.broadcast %16 : vector<1x128xf32> to vector<64x128xf32>
    %19 = arith.mulf %17, %18 : vector<64x128xf32>
    %20 = arith.addf %14, %19 : vector<64x128xf32>
    %21 = vector.extract_strided_slice %3 {offsets = [0, 2], sizes = [64, 1], strides = [1, 1]} : vector<64x3xf32> to vector<64x1xf32>
    %22 = vector.extract_strided_slice %1 {offsets = [2, 0], sizes = [1, 128], strides = [1, 1]} : vector<3x128xf32> to vector<1x128xf32>
    %23 = vector.broadcast %21 : vector<64x1xf32> to vector<64x128xf32>
    %24 = vector.broadcast %22 : vector<1x128xf32> to vector<64x128xf32>
    %25 = arith.mulf %23, %24 : vector<64x128xf32>
    %26 = arith.addf %20, %25 : vector<64x128xf32>
    %cst_6 = arith.constant 2.000000e+00 : f32
    %27 = vector.broadcast %cst_6 : f32 to vector<64x128xf32>
    %28 = arith.mulf %27, %26 : vector<64x128xf32>
    %29 = vector.broadcast %9 : vector<64x1xf32> to vector<64x128xf32>
    %30 = arith.subf %29, %28 : vector<64x128xf32>
    %31 = tpu.iota {dimensions = array<i32: 0>} : vector<64x128xi32>
    %cst_7 = arith.constant dense<0x7F800000> : vector<128xf32>
    %32 = vector.multi_reduction <minimumf>, %30, %cst_7 [0] : vector<64x128xf32> to vector<128xf32>
    %33 = vector.shape_cast %32 : vector<128xf32> to vector<1x128xf32>
    %34 = vector.broadcast %33 : vector<1x128xf32> to vector<64x128xf32>
    %35 = arith.cmpf oeq, %30, %34 : vector<64x128xf32>
    %c64_i32 = arith.constant 64 : i32
    %36 = vector.broadcast %c64_i32 : i32 to vector<64x128xi32>
    %37 = arith.select %35, %31, %36 : vector<64x128xi1>, vector<64x128xi32>
    %cst_8 = arith.constant dense<2147483647> : vector<128xi32>
    %38 = vector.multi_reduction <minsi>, %37, %cst_8 [0] : vector<64x128xi32> to vector<128xi32>
    %39 = vector.shape_cast %38 : vector<128xi32> to vector<1x128xi32>
    %40 = vector.broadcast %39 : vector<1x128xi32> to vector<64x128xi32>
    %41 = arith.cmpi eq, %31, %40 : vector<64x128xi32>
    %42 = arith.addf %33, %6 : vector<1x128xf32>
    %cst_9 = arith.constant 0.000000e+00 : f32
    %43 = vector.broadcast %cst_9 : f32 to vector<1x128xf32>
    %44 = arith.maximumf %42, %43 : vector<1x128xf32>
    %45 = math.sqrt %44 : vector<1x128xf32>
    %cst_10 = arith.constant 9.99999993E-9 : f32
    %46 = vector.broadcast %cst_10 : f32 to vector<1x128xf32>
    %47 = arith.addf %45, %46 : vector<1x128xf32>
    %cst_11 = arith.constant 1.000000e+00 : f32
    %48 = vector.broadcast %cst_11 : f32 to vector<1x128xf32>
    %49 = arith.divf %48, %47 : vector<1x128xf32>
    %cst_12 = arith.constant 1.000000e+30 : f32
    %50 = vector.broadcast %cst_12 : f32 to vector<64x128xf32>
    %51 = arith.select %41, %50, %30 : vector<64x128xi1>, vector<64x128xf32>
    %cst_13 = arith.constant dense<0x7F800000> : vector<128xf32>
    %52 = vector.multi_reduction <minimumf>, %51, %cst_13 [0] : vector<64x128xf32> to vector<128xf32>
    %53 = vector.shape_cast %52 : vector<128xf32> to vector<1x128xf32>
    %54 = vector.broadcast %53 : vector<1x128xf32> to vector<64x128xf32>
    %55 = arith.cmpf oeq, %51, %54 : vector<64x128xf32>
    %c64_i32_14 = arith.constant 64 : i32
    %56 = vector.broadcast %c64_i32_14 : i32 to vector<64x128xi32>
    %57 = arith.select %55, %31, %56 : vector<64x128xi1>, vector<64x128xi32>
    %cst_15 = arith.constant dense<2147483647> : vector<128xi32>
    %58 = vector.multi_reduction <minsi>, %57, %cst_15 [0] : vector<64x128xi32> to vector<128xi32>
    %59 = vector.shape_cast %58 : vector<128xi32> to vector<1x128xi32>
    %60 = vector.broadcast %59 : vector<1x128xi32> to vector<64x128xi32>
    %61 = arith.cmpi eq, %31, %60 : vector<64x128xi32>
    %62 = arith.addf %53, %6 : vector<1x128xf32>
    %cst_16 = arith.constant 0.000000e+00 : f32
    %63 = vector.broadcast %cst_16 : f32 to vector<1x128xf32>
    %64 = arith.maximumf %62, %63 : vector<1x128xf32>
    %65 = math.sqrt %64 : vector<1x128xf32>
    %cst_17 = arith.constant 9.99999993E-9 : f32
    %66 = vector.broadcast %cst_17 : f32 to vector<1x128xf32>
    %67 = arith.addf %65, %66 : vector<1x128xf32>
    %cst_18 = arith.constant 1.000000e+00 : f32
    %68 = vector.broadcast %cst_18 : f32 to vector<1x128xf32>
    %69 = arith.divf %68, %67 : vector<1x128xf32>
    %cst_19 = arith.constant 1.000000e+30 : f32
    %70 = vector.broadcast %cst_19 : f32 to vector<64x128xf32>
    %71 = arith.select %61, %70, %51 : vector<64x128xi1>, vector<64x128xf32>
    %cst_20 = arith.constant dense<0x7F800000> : vector<128xf32>
    %72 = vector.multi_reduction <minimumf>, %71, %cst_20 [0] : vector<64x128xf32> to vector<128xf32>
    %73 = vector.shape_cast %72 : vector<128xf32> to vector<1x128xf32>
    %74 = vector.broadcast %73 : vector<1x128xf32> to vector<64x128xf32>
    %75 = arith.cmpf oeq, %71, %74 : vector<64x128xf32>
    %c64_i32_21 = arith.constant 64 : i32
    %76 = vector.broadcast %c64_i32_21 : i32 to vector<64x128xi32>
    %77 = arith.select %75, %31, %76 : vector<64x128xi1>, vector<64x128xi32>
    %cst_22 = arith.constant dense<2147483647> : vector<128xi32>
    %78 = vector.multi_reduction <minsi>, %77, %cst_22 [0] : vector<64x128xi32> to vector<128xi32>
    %79 = vector.shape_cast %78 : vector<128xi32> to vector<1x128xi32>
    %80 = vector.broadcast %79 : vector<1x128xi32> to vector<64x128xi32>
    %81 = arith.cmpi eq, %31, %80 : vector<64x128xi32>
    %82 = arith.addf %73, %6 : vector<1x128xf32>
    %cst_23 = arith.constant 0.000000e+00 : f32
    %83 = vector.broadcast %cst_23 : f32 to vector<1x128xf32>
    %84 = arith.maximumf %82, %83 : vector<1x128xf32>
    %85 = math.sqrt %84 : vector<1x128xf32>
    %cst_24 = arith.constant 9.99999993E-9 : f32
    %86 = vector.broadcast %cst_24 : f32 to vector<1x128xf32>
    %87 = arith.addf %85, %86 : vector<1x128xf32>
    %cst_25 = arith.constant 1.000000e+00 : f32
    %88 = vector.broadcast %cst_25 : f32 to vector<1x128xf32>
    %89 = arith.divf %88, %87 : vector<1x128xf32>
    %90 = arith.addf %49, %69 : vector<1x128xf32>
    %91 = arith.addf %90, %89 : vector<1x128xf32>
    %cst_26 = arith.constant 1.000000e+00 : f32
    %92 = vector.broadcast %cst_26 : f32 to vector<1x128xf32>
    %93 = arith.divf %92, %91 : vector<1x128xf32>
    %94 = arith.mulf %49, %93 : vector<1x128xf32>
    %cst_27 = arith.constant 0.000000e+00 : f32
    %95 = vector.shape_cast %94 : vector<1x128xf32> to vector<1x128xf32>
    %96 = vector.broadcast %95 : vector<1x128xf32> to vector<64x128xf32>
    %97 = vector.broadcast %cst_27 : f32 to vector<64x128xf32>
    %98 = arith.select %41, %96, %97 : vector<64x128xi1>, vector<64x128xf32>
    %99 = arith.mulf %69, %93 : vector<1x128xf32>
    %cst_28 = arith.constant 0.000000e+00 : f32
    %100 = vector.shape_cast %99 : vector<1x128xf32> to vector<1x128xf32>
    %101 = vector.broadcast %100 : vector<1x128xf32> to vector<64x128xf32>
    %102 = vector.broadcast %cst_28 : f32 to vector<64x128xf32>
    %103 = arith.select %61, %101, %102 : vector<64x128xi1>, vector<64x128xf32>
    %104 = arith.addf %98, %103 : vector<64x128xf32>
    %105 = arith.mulf %89, %93 : vector<1x128xf32>
    %cst_29 = arith.constant 0.000000e+00 : f32
    %106 = vector.shape_cast %105 : vector<1x128xf32> to vector<1x128xf32>
    %107 = vector.broadcast %106 : vector<1x128xf32> to vector<64x128xf32>
    %108 = vector.broadcast %cst_29 : f32 to vector<64x128xf32>
    %109 = arith.select %81, %107, %108 : vector<64x128xi1>, vector<64x128xf32>
    %110 = arith.addf %104, %109 : vector<64x128xf32>
    %c0_30 = arith.constant 0 : index
    %c0_31 = arith.constant 0 : index
    %c0_32 = arith.constant 0 : index
    %111 = vector.load %arg5[%c0_30, %c0_31, %c0_32] : memref<1x32x64xf32, #tpu.memory_space<vmem>>, vector<1x32x64xf32>
    %112 = vector.shape_cast %111 : vector<1x32x64xf32> to vector<32x64xf32>
    %cst_33 = arith.constant dense<0.000000e+00> : vector<32x128xf32>
    %113 = tpu.matmul %112, %110, %cst_33 {dimension_numbers = #tpu.dot_dimension_numbers<[1], [0], [0], [1], [0, 0, 1, 1], [], []>} : vector<32x64xf32>, vector<64x128xf32>, vector<32x128xf32> -> vector<32x128xf32>
    %c0_34 = arith.constant 0 : index
    %c0_35 = arith.constant 0 : index
    %114 = vector.load %arg11[%c0_34, %c0_35] : memref<48x128xf32, #tpu.memory_space<vmem>>, vector<32x128xf32>
    tpu.vector_store %arg11[%c0_34, %c0_35], %113 {strides = array<i32>} : memref<48x128xf32, #tpu.memory_space<vmem>>, vector<32x128xf32>,
    %c0_36 = arith.constant 0 : index
    %c0_37 = arith.constant 0 : index
    %c0_38 = arith.constant 0 : index
    %115 = vector.load %arg4[%c0_36, %c0_37, %c0_38] : memref<1x16x128xf32, #tpu.memory_space<vmem>>, vector<1x16x128xf32>
    %116 = vector.shape_cast %115 : vector<1x16x128xf32> to vector<16x128xf32>
    %c32 = arith.constant 32 : index
    %c0_39 = arith.constant 0 : index
    %117 = vector.load %arg11[%c32, %c0_39] : memref<48x128xf32, #tpu.memory_space<vmem>>, vector<16x128xf32>
    tpu.vector_store %arg11[%c32, %c0_39], %116 {strides = array<i32>} : memref<48x128xf32, #tpu.memory_space<vmem>>, vector<16x128xf32>,
    %c0_40 = arith.constant 0 : index
    %c0_41 = arith.constant 0 : index
    %118 = vector.load %arg11[%c0_40, %c0_41] : memref<48x128xf32, #tpu.memory_space<vmem>>, vector<48x128xf32>
    %c0_42 = arith.constant 0 : index
    %c0_43 = arith.constant 0 : index
    %119 = vector.load %arg6[%c0_42, %c0_43] : memref<64x48xf32, #tpu.memory_space<vmem>>, vector<64x48xf32>
    %c0_44 = arith.constant 0 : index
    %c0_45 = arith.constant 0 : index
    %120 = vector.load %arg7[%c0_44, %c0_45] : memref<64x2xf32, #tpu.memory_space<vmem>>, vector<64x2xf32>
    %cst_46 = arith.constant dense<0.000000e+00> : vector<64x128xf32>
    %121 = tpu.matmul %119, %118, %cst_46 {dimension_numbers = #tpu.dot_dimension_numbers<[1], [0], [0], [1], [0, 0, 1, 1], [], []>} : vector<64x48xf32>, vector<48x128xf32>, vector<64x128xf32> -> vector<64x128xf32>
    %122 = vector.extract_strided_slice %120 {offsets = [0, 0], sizes = [64, 1], strides = [1, 1]} : vector<64x2xf32> to vector<64x1xf32>
    %123 = vector.broadcast %122 : vector<64x1xf32> to vector<64x128xf32>
    %124 = arith.mulf %121, %123 : vector<64x128xf32>
    %125 = vector.extract_strided_slice %120 {offsets = [0, 1], sizes = [64, 1], strides = [1, 1]} : vector<64x2xf32> to vector<64x1xf32>
    %126 = vector.broadcast %125 : vector<64x1xf32> to vector<64x128xf32>
    %127 = arith.addf %124, %126 : vector<64x128xf32>
    %cst_47 = arith.constant 0.000000e+00 : f32
    %128 = vector.broadcast %cst_47 : f32 to vector<64x128xf32>
    %129 = arith.maximumf %127, %128 : vector<64x128xf32>
    %c0_48 = arith.constant 0 : index
    %c0_49 = arith.constant 0 : index
    %130 = vector.load %arg8[%c0_48, %c0_49] : memref<64x64xf32, #tpu.memory_space<vmem>>, vector<64x64xf32>
    %c0_50 = arith.constant 0 : index
    %c0_51 = arith.constant 0 : index
    %131 = vector.load %arg9[%c0_50, %c0_51] : memref<64x2xf32, #tpu.memory_space<vmem>>, vector<64x2xf32>
    %cst_52 = arith.constant dense<0.000000e+00> : vector<64x128xf32>
    %132 = tpu.matmul %130, %129, %cst_52 {dimension_numbers = #tpu.dot_dimension_numbers<[1], [0], [0], [1], [0, 0, 1, 1], [], []>} : vector<64x64xf32>, vector<64x128xf32>, vector<64x128xf32> -> vector<64x128xf32>
    %133 = vector.extract_strided_slice %131 {offsets = [0, 0], sizes = [64, 1], strides = [1, 1]} : vector<64x2xf32> to vector<64x1xf32>
    %134 = vector.broadcast %133 : vector<64x1xf32> to vector<64x128xf32>
    %135 = arith.mulf %132, %134 : vector<64x128xf32>
    %136 = vector.extract_strided_slice %131 {offsets = [0, 1], sizes = [64, 1], strides = [1, 1]} : vector<64x2xf32> to vector<64x1xf32>
    %137 = vector.broadcast %136 : vector<64x1xf32> to vector<64x128xf32>
    %138 = arith.addf %135, %137 : vector<64x128xf32>
    %cst_53 = arith.constant 0.000000e+00 : f32
    %139 = vector.broadcast %cst_53 : f32 to vector<64x128xf32>
    %140 = arith.maximumf %138, %139 : vector<64x128xf32>
    %c0_54 = arith.constant 0 : index
    %c0_55 = arith.constant 0 : index
    %c0_56 = arith.constant 0 : index
    %141 = vector.load %arg10[%c0_54, %c0_55, %c0_56] : memref<1x64x128xf32, #tpu.memory_space<vmem>>, vector<1x64x128xf32>
    %142 = vector.shape_cast %141 : vector<1x64x128xf32> to vector<64x128xf32>
    %143 = vector.shape_cast %140 : vector<64x128xf32> to vector<1x64x128xf32>
    tpu.vector_store %arg10[%c0_54, %c0_55, %c0_56], %143 {strides = array<i32>} : memref<1x64x128xf32, #tpu.memory_space<vmem>>, vector<1x64x128xf32>,
    return
  }
  func.func @transform_0(%arg0: i32, %arg1: i32) -> (i32, i32, i32) {
    %c0_i32 = arith.constant 0 : i32
    %c0_i32_0 = arith.constant 0 : i32
    return %arg0, %c0_i32, %arg1 : i32, i32, i32
  }
  func.func @transform_1(%arg0: i32, %arg1: i32) -> (i32, i32, i32) {
    %c0_i32 = arith.constant 0 : i32
    %c0_i32_0 = arith.constant 0 : i32
    %c0_i32_1 = arith.constant 0 : i32
    return %arg0, %c0_i32, %c0_i32_0 : i32, i32, i32
  }
  func.func @transform_2(%arg0: i32, %arg1: i32) -> (i32, i32, i32) {
    %c0_i32 = arith.constant 0 : i32
    %c0_i32_0 = arith.constant 0 : i32
    return %arg0, %c0_i32, %arg1 : i32, i32, i32
  }
  func.func @transform_3(%arg0: i32, %arg1: i32) -> (i32, i32, i32) {
    %c0_i32 = arith.constant 0 : i32
    %c0_i32_0 = arith.constant 0 : i32
    %c0_i32_1 = arith.constant 0 : i32
    return %arg0, %c0_i32, %c0_i32_0 : i32, i32, i32
  }
  func.func @transform_4(%arg0: i32, %arg1: i32) -> (i32, i32) {
    %c0_i32 = arith.constant 0 : i32
    %c0_i32_0 = arith.constant 0 : i32
    %c0_i32_1 = arith.constant 0 : i32
    return %c0_i32, %c0_i32_0 : i32, i32
  }
  func.func @transform_5(%arg0: i32, %arg1: i32) -> (i32, i32) {
    %c0_i32 = arith.constant 0 : i32
    %c0_i32_0 = arith.constant 0 : i32
    %c0_i32_1 = arith.constant 0 : i32
    return %c0_i32, %c0_i32_0 : i32, i32
  }
  func.func @transform_6(%arg0: i32, %arg1: i32) -> (i32, i32) {
    %c0_i32 = arith.constant 0 : i32
    %c0_i32_0 = arith.constant 0 : i32
    %c0_i32_1 = arith.constant 0 : i32
    return %c0_i32, %c0_i32_0 : i32, i32
  }
  func.func @transform_7(%arg0: i32, %arg1: i32) -> (i32, i32) {
    %c0_i32 = arith.constant 0 : i32
    %c0_i32_0 = arith.constant 0 : i32
    %c0_i32_1 = arith.constant 0 : i32
    return %c0_i32, %c0_i32_0 : i32, i32
  }
  func.func @transform_8(%arg0: i32, %arg1: i32) -> (i32, i32, i32) {
    %c0_i32 = arith.constant 0 : i32
    %c0_i32_0 = arith.constant 0 : i32
    return %arg0, %c0_i32, %arg1 : i32, i32, i32
  }
}

</mosaic_0001>

<llo_original>
// kernel: tpu_custom_call.1
$region0: #{tpu_custom_call.1}
  #allocation0 [shape = 'u32[]', space=smem, size = 0x4, offset = 0x4, fixed_abs, tag = 'smem constant byte address 0x4 - core index']
  #allocation1 [shape = 'u32[72,128]{1,0:T(1,128)}', space=vmem, size = 0x9000, scoped, tag = 'internal scratch']
  #allocation2 [shape = 'f32[48,128]{1,0:T(8,128)}', space=vmem, size = 0x6000, scoped, tag = 'scratch operand']
  %s0 = inlined_call_operand.vmem [shape: f32[2,3,128], index: 0, kind: input, shape index: {}]
  %s1 = inlined_call_operand.vmem [shape: f32[2,64,3], index: 1, kind: input, shape index: {}]
  %s2 = inlined_call_operand.vmem [shape: f32[2,16,128], index: 2, kind: input, shape index: {}]
  %s3 = inlined_call_operand.vmem [shape: f32[2,32,64], index: 3, kind: input, shape index: {}]
  %s4 = inlined_call_operand.vmem [shape: f32[64,48], index: 4, kind: input, shape index: {}]
  %s5 = inlined_call_operand.vmem [shape: f32[64,2], index: 5, kind: input, shape index: {}]
  %s6 = inlined_call_operand.vmem [shape: f32[64,64], index: 6, kind: input, shape index: {}]
  %s7 = inlined_call_operand.vmem [shape: f32[64,2], index: 7, kind: input, shape index: {}]
  %s8 = inlined_call_operand.hbm [shape: f32[2,64,128], index: 8, kind: output, shape index: {}]
  %s9 = sld [smem:[#allocation0]]
  $region65: #{tpu_custom_call.1} parent=0
    _
  %s11 = ssub.s32 1, %s9
  %s12 = scalar_select 0, %s11, %s9
  $region1: #{tpu_custom_call.1} parent=0
    #allocation3 [shape = 'u8[65536]{0}', space=vmem, size = 0x10000, scoped, tag = 'output window, operand 0']
    #allocation4 [shape = 's32[2]{0}', space=sflag, size = 0x8, scoped, tag = 'scoped memory for tpu_custom_call.1']
    %13 = vsyncpa [#allocation4], 0
    %s14 = scalar_lea.sflag [#allocation4], 1
    %15 = vsyncpa %s14, 0
    loop: start=0, step=1, limit=4
    $region2: #{tpu_custom_call.1} parent=1 // loop_pre_header
      _
    $region3: #{tpu_custom_call.1} parent=1 // loop_header
      %s17 = sphi 0, %s21
      %p18 = scmp.ge.s32.totalorder %s17, 4
      %s24 = sphi 0, %s36
      %s25 = sphi 0, %s32
      %s26 = sphi 0, %s24
      %s27 = sphi 0, %s25
      %s28 = sphi 0, %s26
      %s29 = sphi 0, %s27
      %s41 = sphi 0, %s43
      %s44 = sphi 0, %s41
      %s45 = sphi 0, %s44
      %s61 = sphi 0, %s45
      %s67 = sphi 0, %s69
      %s70 = sphi 0, %s67
      %s71 = sphi 0, %s70
      %s87 = sphi 0, %s71
      %s95 = sphi 0, %s97
      %s98 = sphi 0, %s95
      %s99 = sphi 0, %s98
      %s115 = sphi 0, %s99
      %s121 = sphi 0, %s123
      %s124 = sphi 0, %s121
      %s125 = sphi 0, %s124
      %s141 = sphi 0, %s125
      %s145 = sphi 0, %s145
      %s147 = sphi 0, %s145
      %s148 = sphi 0, %s147
      %s162 = sphi 0, %s148
      %s166 = sphi 0, %s166
      %s168 = sphi 0, %s166
      %s169 = sphi 0, %s168
      %s183 = sphi 0, %s169
      %s187 = sphi 0, %s187
      %s189 = sphi 0, %s187
      %s190 = sphi 0, %s189
      %s204 = sphi 0, %s190
      %s208 = sphi 0, %s208
      %s210 = sphi 0, %s208
      %s211 = sphi 0, %s210
      %s225 = sphi 0, %s211
      %s233 = sphi 0, %s235
      %s236 = sphi 0, %s233
      %s237 = sphi 0, %s236
      %s253 = sphi 0, %s237
    $region4: #{tpu_custom_call.1} parent=1 // loop_header_branch
      %20 = sbr.rel (%p18) target = $region8
    $region5: #{tpu_custom_call.1} parent=1 // loop_body
      %s22 = ssub.s32 %s17, 1
      %s23 = ssub.s32 %s17, 2
      %s30 = sadd.s32 1, %s25
      %p31 = scmp.ge.s32.totalorder %s30, 1
      %s32 = scalar_select %p31, 0, %s30
      %s33 = sadd.s32 1, %s24
      %s34 = scalar_select %p31, %s33, %s24
      %p35 = scmp.ge.s32.totalorder %s34, 2
      %s36 = scalar_select %p35, 0, %s34
      %s37 = ssub.s32 %s24, %s36
      %s38 = ssub.s32 %s25, %s32
      %s39 = sor.u32 %s37, %s38
      %p40 = scmp.eq.s32.totalorder %s39, 0
      %s42 = sadd.s32 %s41, 1
      %s43 = scalar_select %p40, %s41, %s42
      %p46 = pneg %p40
      %p47 = scmp.eq.s32.totalorder %s17, 1
      %p48 = por %p46, %p47
      %p49 = scmp.ne.s32.totalorder %s41, %s44
      %p50 = scmp.eq.s32.totalorder %s17, 0
      %p51 = por %p49, %p50
      %p52 = scmp.ne.s32.totalorder %s41, %s44
      %p53 = scmp.eq.s32.totalorder %s22, 1
      %p54 = por %p52, %p53
      %p55 = scmp.ne.s32.totalorder %s44, %s45
      %p56 = scmp.eq.s32.totalorder %s22, 0
      %p57 = por %p55, %p56
      %p58 = scmp.ne.s32.totalorder %s44, %s45
      %p59 = scmp.eq.s32.totalorder %s23, 1
      %p60 = por %p58, %p59
      %p62 = scmp.ne.s32.totalorder %s45, %s61
      %p63 = scmp.eq.s32.totalorder %s23, 0
      %p64 = por %p62, %p63
      %s65 = ssub.s32 %s24, %s36
      %p66 = scmp.eq.s32.totalorder %s65, 0
      %s68 = sadd.s32 %s67, 1
      %s69 = scalar_select %p66, %s67, %s68
      %p72 = pneg %p66
      %p73 = scmp.eq.s32.totalorder %s17, 1
      %p74 = por %p72, %p73
      %p75 = scmp.ne.s32.totalorder %s67, %s70
      %p76 = scmp.eq.s32.totalorder %s17, 0
      %p77 = por %p75, %p76
      %p78 = scmp.ne.s32.totalorder %s67, %s70
      %p79 = scmp.eq.s32.totalorder %s22, 1
      %p80 = por %p78, %p79
      %p81 = scmp.ne.s32.totalorder %s70, %s71
      %p82 = scmp.eq.s32.totalorder %s22, 0
      %p83 = por %p81, %p82
      %p84 = scmp.ne.s32.totalorder %s70, %s71
      %p85 = scmp.eq.s32.totalorder %s23, 1
      %p86 = por %p84, %p85
      %p88 = scmp.ne.s32.totalorder %s71, %s87
      %p89 = scmp.eq.s32.totalorder %s23, 0
      %p90 = por %p88, %p89
      %s91 = ssub.s32 %s24, %s36
      %s92 = ssub.s32 %s25, %s32
      %s93 = sor.u32 %s91, %s92
      %p94 = scmp.eq.s32.totalorder %s93, 0
      %s96 = sadd.s32 %s95, 1
      %s97 = scalar_select %p94, %s95, %s96
      %p100 = pneg %p94
      %p101 = scmp.eq.s32.totalorder %s17, 1
      %p102 = por %p100, %p101
      %p103 = scmp.ne.s32.totalorder %s95, %s98
      %p104 = scmp.eq.s32.totalorder %s17, 0
      %p105 = por %p103, %p104
      %p106 = scmp.ne.s32.totalorder %s95, %s98
      %p107 = scmp.eq.s32.totalorder %s22, 1
      %p108 = por %p106, %p107
      %p109 = scmp.ne.s32.totalorder %s98, %s99
      %p110 = scmp.eq.s32.totalorder %s22, 0
      %p111 = por %p109, %p110
      %p112 = scmp.ne.s32.totalorder %s98, %s99
      %p113 = scmp.eq.s32.totalorder %s23, 1
      %p114 = por %p112, %p113
      %p116 = scmp.ne.s32.totalorder %s99, %s115
      %p117 = scmp.eq.s32.totalorder %s23, 0
      %p118 = por %p116, %p117
      %s119 = ssub.s32 %s24, %s36
      %p120 = scmp.eq.s32.totalorder %s119, 0
      %s122 = sadd.s32 %s121, 1
      %s123 = scalar_select %p120, %s121, %s122
      %p126 = pneg %p120
      %p127 = scmp.eq.s32.totalorder %s17, 1
      %p128 = por %p126, %p127
      %p129 = scmp.ne.s32.totalorder %s121, %s124
      %p130 = scmp.eq.s32.totalorder %s17, 0
      %p131 = por %p129, %p130
      %p132 = scmp.ne.s32.totalorder %s121, %s124
      %p133 = scmp.eq.s32.totalorder %s22, 1
      %p134 = por %p132, %p133
      %p135 = scmp.ne.s32.totalorder %s124, %s125
      %p136 = scmp.eq.s32.totalorder %s22, 0
      %p137 = por %p135, %p136
      %p138 = scmp.ne.s32.totalorder %s124, %s125
      %p139 = scmp.eq.s32.totalorder %s23, 1
      %p140 = por %p138, %p139
      %p142 = scmp.ne.s32.totalorder %s125, %s141
      %p143 = scmp.eq.s32.totalorder %s23, 0
      %p144 = por %p142, %p143
      %s146 = sadd.s32 %s145, 1
      %p149 = scmp.eq.s32.totalorder %s17, 1
      %p150 = scmp.ne.s32.totalorder %s145, %s147
      %p151 = scmp.eq.s32.totalorder %s17, 0
      %p152 = por %p150, %p151
      %p153 = scmp.ne.s32.totalorder %s145, %s147
      %p154 = scmp.eq.s32.totalorder %s22, 1
      %p155 = por %p153, %p154
      %p156 = scmp.ne.s32.totalorder %s147, %s148
      %p157 = scmp.eq.s32.totalorder %s22, 0
      %p158 = por %p156, %p157
      %p159 = scmp.ne.s32.totalorder %s147, %s148
      %p160 = scmp.eq.s32.totalorder %s23, 1
      %p161 = por %p159, %p160
      %p163 = scmp.ne.s32.totalorder %s148, %s162
      %p164 = scmp.eq.s32.totalorder %s23, 0
      %p165 = por %p163, %p164
      %s167 = sadd.s32 %s166, 1
      %p170 = scmp.eq.s32.totalorder %s17, 1
      %p171 = scmp.ne.s32.totalorder %s166, %s168
      %p172 = scmp.eq.s32.totalorder %s17, 0
      %p173 = por %p171, %p172
      %p174 = scmp.ne.s32.totalorder %s166, %s168
      %p175 = scmp.eq.s32.totalorder %s22, 1
      %p176 = por %p174, %p175
      %p177 = scmp.ne.s32.totalorder %s168, %s169
      %p178 = scmp.eq.s32.totalorder %s22, 0
      %p179 = por %p177, %p178
      %p180 = scmp.ne.s32.totalorder %s168, %s169
      %p181 = scmp.eq.s32.totalorder %s23, 1
      %p182 = por %p180, %p181
      %p184 = scmp.ne.s32.totalorder %s169, %s183
      %p185 = scmp.eq.s32.totalorder %s23, 0
      %p186 = por %p184, %p185
      %s188 = sadd.s32 %s187, 1
      %p191 = scmp.eq.s32.totalorder %s17, 1
      %p192 = scmp.ne.s32.totalorder %s187, %s189
      %p193 = scmp.eq.s32.totalorder %s17, 0
      %p194 = por %p192, %p193
      %p195 = scmp.ne.s32.totalorder %s187, %s189
      %p196 = scmp.eq.s32.totalorder %s22, 1
      %p197 = por %p195, %p196
      %p198 = scmp.ne.s32.totalorder %s189, %s190
      %p199 = scmp.eq.s32.totalorder %s22, 0
      %p200 = por %p198, %p199
      %p201 = scmp.ne.s32.totalorder %s189, %s190
      %p202 = scmp.eq.s32.totalorder %s23, 1
      %p203 = por %p201, %p202
      %p205 = scmp.ne.s32.totalorder %s190, %s204
      %p206 = scmp.eq.s32.totalorder %s23, 0
      %p207 = por %p205, %p206
      %s209 = sadd.s32 %s208, 1
      %p212 = scmp.eq.s32.totalorder %s17, 1
      %p213 = scmp.ne.s32.totalorder %s208, %s210
      %p214 = scmp.eq.s32.totalorder %s17, 0
      %p215 = por %p213, %p214
      %p216 = scmp.ne.s32.totalorder %s208, %s210
      %p217 = scmp.eq.s32.totalorder %s22, 1
      %p218 = por %p216, %p217
      %p219 = scmp.ne.s32.totalorder %s210, %s211
      %p220 = scmp.eq.s32.totalorder %s22, 0
      %p221 = por %p219, %p220
      %p222 = scmp.ne.s32.totalorder %s210, %s211
      %p223 = scmp.eq.s32.totalorder %s23, 1
      %p224 = por %p222, %p223
      %p226 = scmp.ne.s32.totalorder %s211, %s225
      %p227 = scmp.eq.s32.totalorder %s23, 0
      %p228 = por %p226, %p227
      %s229 = ssub.s32 %s24, %s36
      %s230 = ssub.s32 %s25, %s32
      %s231 = sor.u32 %s229, %s230
      %p232 = scmp.eq.s32.totalorder %s231, 0
      %s234 = sadd.s32 %s233, 1
      %s235 = scalar_select %p232, %s233, %s234
      %p238 = pneg %p232
      %p239 = scmp.eq.s32.totalorder %s17, 1
      %p240 = por %p238, %p239
      %p241 = scmp.ne.s32.totalorder %s233, %s236
      %p242 = scmp.eq.s32.totalorder %s17, 0
      %p243 = por %p241, %p242
      %p244 = scmp.ne.s32.totalorder %s233, %s236
      %p245 = scmp.eq.s32.totalorder %s22, 1
      %p246 = por %p244, %p245
      %p247 = scmp.ne.s32.totalorder %s236, %s237
      %p248 = scmp.eq.s32.totalorder %s22, 0
      %p249 = por %p247, %p248
      %p250 = scmp.ne.s32.totalorder %s236, %s237
      %p251 = scmp.eq.s32.totalorder %s23, 1
      %p252 = por %p250, %p251
      %p254 = scmp.ne.s32.totalorder %s237, %s253
      %p255 = scmp.eq.s32.totalorder %s23, 0
      %p256 = por %p254, %p255
      %p257 = scmp.le.s32.totalorder 1, %s17
      %p258 = scmp.lt.s32.totalorder %s17, 3
      %p259 = pnand %p257, %p258
      %p260 = pneg %p259
      // Predicated region
      $region9: #{tpu_custom_call.1} parent=5 // pred_check
        _
      $region10: #{tpu_custom_call.1} parent=5 // pred_check_branch
        %262 = sbr.rel (%p259) target = $region12
      $region11: #{tpu_custom_call.1} parent=5 // pred_region
        %s263 = ssub.s32 %s17, 1
        // Predicated region
        $region13: #{tpu_custom_call.1} parent=11 // pred_check
          %p264 = pneg %p158
        $region14: #{tpu_custom_call.1} parent=11 // pred_check_branch
          %266 = sbr.rel (%p264) target = $region16
        $region15: #{tpu_custom_call.1} parent=11 // pred_region
          _
        $region16: #{tpu_custom_call.1} parent=11 // pred_fallthru
          _
        // Predicated region
        $region17: #{tpu_custom_call.1} parent=11 // pred_check
          %p267 = pneg %p179
        $region18: #{tpu_custom_call.1} parent=11 // pred_check_branch
          %269 = sbr.rel (%p267) target = $region20
        $region19: #{tpu_custom_call.1} parent=11 // pred_region
          _
        $region20: #{tpu_custom_call.1} parent=11 // pred_fallthru
          _
        // Predicated region
        $region21: #{tpu_custom_call.1} parent=11 // pred_check
          %p270 = pneg %p200
        $region22: #{tpu_custom_call.1} parent=11 // pred_check_branch
          %272 = sbr.rel (%p270) target = $region24
        $region23: #{tpu_custom_call.1} parent=11 // pred_region
          _
        $region24: #{tpu_custom_call.1} parent=11 // pred_fallthru
          _
        // Predicated region
        $region25: #{tpu_custom_call.1} parent=11 // pred_check
          %p273 = pneg %p221
        $region26: #{tpu_custom_call.1} parent=11 // pred_check_branch
          %275 = sbr.rel (%p273) target = $region28
        $region27: #{tpu_custom_call.1} parent=11 // pred_region
          _
        $region28: #{tpu_custom_call.1} parent=11 // pred_fallthru
          _
      $region12: #{tpu_custom_call.1} parent=5 // pred_fallthru
        _
      %p276 = scmp.lt.s32.totalorder %s17, 2
      // Predicated region
      $region29: #{tpu_custom_call.1} parent=5 // pred_check
        %p277 = pneg %p276
      $region30: #{tpu_custom_call.1} parent=5 // pred_check_branch
        %279 = sbr.rel (%p277) target = $region32
      $region31: #{tpu_custom_call.1} parent=5 // pred_region
        // Predicated region
        $region33: #{tpu_custom_call.1} parent=31 // pred_check
          %p280 = pneg %p51
        $region34: #{tpu_custom_call.1} parent=31 // pred_check_branch
          %282 = sbr.rel (%p280) target = $region36
        $region35: #{tpu_custom_call.1} parent=31 // pred_region
          %p283 = scmp.lt.s32.totalorder %s24, 1
          %s284 = scalar_select %p283, %s24, 1
          %p285 = scmp.lt.s32.totalorder %s25, 0
          %s286 = scalar_select %p285, %s25, 0
          %s287 = sadd.s32 %s286, %s284
          %s288 = smul.addr %s287, 4
          %s289 = scalar_lea.vmem %s0, %s288
        $region36: #{tpu_custom_call.1} parent=31 // pred_fallthru
          _
        // Predicated region
        $region37: #{tpu_custom_call.1} parent=31 // pred_check
          %p290 = pneg %p77
        $region38: #{tpu_custom_call.1} parent=31 // pred_check_branch
          %292 = sbr.rel (%p290) target = $region40
        $region39: #{tpu_custom_call.1} parent=31 // pred_region
          %p293 = scmp.lt.s32.totalorder %s24, 1
          %s294 = scalar_select %p293, %s24, 1
          %s295 = smul.addr %s294, 8
          %s296 = smul.addr %s295, 8
          %s297 = scalar_lea.vmem %s1, %s296
        $region40: #{tpu_custom_call.1} parent=31 // pred_fallthru
          _
        // Predicated region
        $region41: #{tpu_custom_call.1} parent=31 // pred_check
          %p298 = pneg %p105
        $region42: #{tpu_custom_call.1} parent=31 // pred_check_branch
          %300 = sbr.rel (%p298) target = $region44
        $region43: #{tpu_custom_call.1} parent=31 // pred_region
          %p301 = scmp.lt.s32.totalorder %s24, 1
          %s302 = scalar_select %p301, %s24, 1
          %p303 = scmp.lt.s32.totalorder %s25, 0
          %s304 = scalar_select %p303, %s25, 0
          %s305 = smul.addr %s302, 2
          %s306 = sadd.s32 %s304, %s305
          %s307 = smul.addr %s306, 8
          %s308 = scalar_lea.vmem %s2, %s307
        $region44: #{tpu_custom_call.1} parent=31 // pred_fallthru
          _
        // Predicated region
        $region45: #{tpu_custom_call.1} parent=31 // pred_check
          %p309 = pneg %p131
        $region46: #{tpu_custom_call.1} parent=31 // pred_check_branch
          %311 = sbr.rel (%p309) target = $region48
        $region47: #{tpu_custom_call.1} parent=31 // pred_region
          %p312 = scmp.lt.s32.totalorder %s24, 1
          %s313 = scalar_select %p312, %s24, 1
          %s314 = smul.addr %s313, 4
          %s315 = smul.addr %s314, 8
          %s316 = scalar_lea.vmem %s3, %s315
        $region48: #{tpu_custom_call.1} parent=31 // pred_fallthru
          _
      $region32: #{tpu_custom_call.1} parent=5 // pred_fallthru
        _
      %p317 = scmp.le.s32.totalorder 1, %s17
      %p318 = scmp.lt.s32.totalorder %s17, 3
      %p319 = pnand %p317, %p318
      %p320 = pneg %p319
      // Predicated region
      $region49: #{tpu_custom_call.1} parent=5 // pred_check
        _
      $region50: #{tpu_custom_call.1} parent=5 // pred_check_branch
        %322 = sbr.rel (%p319) target = $region52
      $region51: #{tpu_custom_call.1} parent=5 // pred_region
        %s323 = ssub.s32 %s17, 1
        %p324 = scmp.lt.s32.totalorder %s26, 1
        %s325 = scalar_select %p324, %s26, 1
        %p326 = scmp.lt.s32.totalorder %s27, 0
        %s327 = scalar_select %p326, %s27, 0
        %s328 = sadd.s32 %s327, %s325
        %s329 = smul.addr %s328, 4
        %s330 = scalar_lea.vmem %s0, %s329
        %p331 = pneg %p57
        %p332 = pneg %p54
        %p333 = scmp.lt.s32.totalorder %s26, 1
        %s334 = scalar_select %p333, %s26, 1
        %s335 = smul.addr %s334, 8
        %s336 = smul.addr %s335, 8
        %s337 = scalar_lea.vmem %s1, %s336
        %p338 = pneg %p83
        %p339 = pneg %p80
        %p340 = scmp.lt.s32.totalorder %s26, 1
        %s341 = scalar_select %p340, %s26, 1
        %p342 = scmp.lt.s32.totalorder %s27, 0
        %s343 = scalar_select %p342, %s27, 0
        %s344 = smul.addr %s341, 2
        %s345 = sadd.s32 %s343, %s344
        %s346 = smul.addr %s345, 8
        %s347 = scalar_lea.vmem %s2, %s346
        %p348 = pneg %p111
        %p349 = pneg %p108
        %p350 = scmp.lt.s32.totalorder %s26, 1
        %s351 = scalar_select %p350, %s26, 1
        %s352 = smul.addr %s351, 4
        %s353 = smul.addr %s352, 8
        %s354 = scalar_lea.vmem %s3, %s353
        %p355 = pneg %p137
        %p356 = pneg %p134
        %p357 = pneg %p158
        %p358 = pneg %p155
        %p359 = pneg %p179
        %p360 = pneg %p176
        %p361 = pneg %p200
        %p362 = pneg %p197
        %p363 = pneg %p221
        %p364 = pneg %p218
        %p365 = pneg %p249
        %p366 = pneg %p246
        %s367 = sand.u32 %s236, 1
        %s368 = scalar_lea.sflag [#allocation4], %s367
        %s369 = sand.u32 %s236, 1
        %s370 = smul.addr %s369, 64
        %s371 = scalar_lea.vmem [#allocation3], %s370
        %p372 = scmp.lt.s32.totalorder %s26, 1
        %s373 = scalar_select %p372, %s26, 1
        %p374 = scmp.lt.s32.totalorder %s27, 0
        %s375 = scalar_select %p374, %s27, 0
        %s376 = sadd.s32 %s375, %s373
        %s377 = smul.addr %s376, 4
        %s378 = scalar_lea.vmem %s0, %s377
        %p379 = scmp.lt.s32.totalorder %s26, 1
        %s380 = scalar_select %p379, %s26, 1
        %s381 = smul.addr %s380, 8
        %s382 = smul.addr %s381, 8
        %s383 = scalar_lea.vmem %s1, %s382
        %p384 = scmp.lt.s32.totalorder %s26, 1
        %s385 = scalar_select %p384, %s26, 1
        %p386 = scmp.lt.s32.totalorder %s27, 0
        %s387 = scalar_select %p386, %s27, 0
        %s388 = smul.addr %s385, 2
        %s389 = sadd.s32 %s387, %s388
        %s390 = smul.addr %s389, 8
        %s391 = scalar_lea.vmem %s2, %s390
        %p392 = scmp.lt.s32.totalorder %s26, 1
        %s393 = scalar_select %p392, %s26, 1
        %s394 = smul.addr %s393, 4
        %s395 = smul.addr %s394, 8
        %s396 = scalar_lea.vmem %s3, %s395
        %v397 = vld [vmem:[%s378] sm:$0x7]
        %v398 = vld [vmem:[%s383] sm:$0xff]
        %v399 = vld [vmem:[%s383 + $0x8] sm:$0xff]
        %v400 = vld [vmem:[%s383 + $0x10] sm:$0xff]
        %v401 = vld [vmem:[%s383 + $0x18] sm:$0xff]
        %v402 = vld [vmem:[%s383 + $0x20] sm:$0xff]
        %v403 = vld [vmem:[%s383 + $0x28] sm:$0xff]
        %v404 = vld [vmem:[%s383 + $0x30] sm:$0xff]
        %v405 = vld [vmem:[%s383 + $0x38] sm:$0xff]
        %v406 = vmul.f32 %v397, %v397
        %vm407 = vcmask 1042432
        %v408 = vsel %vm407, %v406, 0.0
        %v409 = vrot.slane %v408, 4
        %v410 = vadd.f32 %v408, %v409
        %v411 = vrot.slane %v410, 2
        %v412 = vadd.f32 %v410, %v411
        %v413 = vrot.slane %v412, 1
        %v414 = vadd.f32 %v412, %v413
        %v415 = vmul.f32 %v398, %v398
        %v416 = vmul.f32 %v399, %v399
        %v417 = vmul.f32 %v400, %v400
        %v418 = vmul.f32 %v401, %v401
        %v419 = vmul.f32 %v402, %v402
        %v420 = vmul.f32 %v403, %v403
        %v421 = vmul.f32 %v404, %v404
        %v422 = vmul.f32 %v405, %v405
        %vm423 = vcmask 23552
        %v424 = vsel %vm423, %v415, 0.0
        %425 = vadd.xlane.f32.xlu0 %v424
        %v426 = vpop.xlane.xlu0 %425
        %v427 = vsel %vm423, %v416, 0.0
        %428 = vadd.xlane.f32.xlu0 %v427
        %v429 = vpop.xlane.xlu0 %428
        %v430 = vsel %vm423, %v417, 0.0
        %431 = vadd.xlane.f32.xlu0 %v430
        %v432 = vpop.xlane.xlu0 %431
        %v433 = vsel %vm423, %v418, 0.0
        %434 = vadd.xlane.f32.xlu0 %v433
        %v435 = vpop.xlane.xlu0 %434
        %v436 = vsel %vm423, %v419, 0.0
        %437 = vadd.xlane.f32.xlu0 %v436
        %v438 = vpop.xlane.xlu0 %437
        %v439 = vsel %vm423, %v420, 0.0
        %440 = vadd.xlane.f32.xlu0 %v439
        %v441 = vpop.xlane.xlu0 %440
        %v442 = vsel %vm423, %v421, 0.0
        %443 = vadd.xlane.f32.xlu0 %v442
        %v444 = vpop.xlane.xlu0 %443
        %v445 = vsel %vm423, %v422, 0.0
        %446 = vadd.xlane.f32.xlu0 %v445
        %v447 = vpop.xlane.xlu0 %446
        %449 = vset.pattern.permute.xlu0 0
        %450 = vperm.xlu0 %449, %v398
        %v451 = vpop.permute.xlu0 %450
        %454 = vset.pattern.permute.xlu0 0
        %455 = vperm.xlu0 %454, %v399
        %v456 = vpop.permute.xlu0 %455
        %459 = vset.pattern.permute.xlu0 0
        %460 = vperm.xlu0 %459, %v400
        %v461 = vpop.permute.xlu0 %460
        %464 = vset.pattern.permute.xlu0 0
        %465 = vperm.xlu0 %464, %v401
        %v466 = vpop.permute.xlu0 %465
        %469 = vset.pattern.permute.xlu0 0
        %470 = vperm.xlu0 %469, %v402
        %v471 = vpop.permute.xlu0 %470
        %474 = vset.pattern.permute.xlu0 0
        %475 = vperm.xlu0 %474, %v403
        %v476 = vpop.permute.xlu0 %475
        %479 = vset.pattern.permute.xlu0 0
        %480 = vperm.xlu0 %479, %v404
        %v481 = vpop.permute.xlu0 %480
        %484 = vset.pattern.permute.xlu0 0
        %485 = vperm.xlu0 %484, %v405
        %v486 = vpop.permute.xlu0 %485
        %v488 = vperm.slane %v397, 0
        %v489 = vmul.f32 %v451, %v488
        %v490 = vmul.f32 %v456, %v488
        %v491 = vmul.f32 %v461, %v488
        %v492 = vmul.f32 %v466, %v488
        %v493 = vmul.f32 %v471, %v488
        %v494 = vmul.f32 %v476, %v488
        %v495 = vmul.f32 %v481, %v488
        %v496 = vmul.f32 %v486, %v488
        %497 = vset.pattern.permute.xlu0 1
        %498 = vperm.xlu0 %497, %v398
        %v499 = vpop.permute.xlu0 %498
        %501 = vset.pattern.permute.xlu0 1
        %502 = vperm.xlu0 %501, %v399
        %v503 = vpop.permute.xlu0 %502
        %505 = vset.pattern.permute.xlu0 1
        %506 = vperm.xlu0 %505, %v400
        %v507 = vpop.permute.xlu0 %506
        %509 = vset.pattern.permute.xlu0 1
        %510 = vperm.xlu0 %509, %v401
        %v511 = vpop.permute.xlu0 %510
        %513 = vset.pattern.permute.xlu0 1
        %514 = vperm.xlu0 %513, %v402
        %v515 = vpop.permute.xlu0 %514
        %517 = vset.pattern.permute.xlu0 1
        %518 = vperm.xlu0 %517, %v403
        %v519 = vpop.permute.xlu0 %518
        %521 = vset.pattern.permute.xlu0 1
        %522 = vperm.xlu0 %521, %v404
        %v523 = vpop.permute.xlu0 %522
        %525 = vset.pattern.permute.xlu0 1
        %526 = vperm.xlu0 %525, %v405
        %v527 = vpop.permute.xlu0 %526
        %v529 = vperm.slane %v397, 1
        %v530 = vmul.f32 %v499, %v529
        %v531 = vmul.f32 %v503, %v529
        %v532 = vmul.f32 %v507, %v529
        %v533 = vmul.f32 %v511, %v529
        %v534 = vmul.f32 %v515, %v529
        %v535 = vmul.f32 %v519, %v529
        %v536 = vmul.f32 %v523, %v529
        %v537 = vmul.f32 %v527, %v529
        %v538 = vadd.f32 %v489, %v530
        %v539 = vadd.f32 %v490, %v531
        %v540 = vadd.f32 %v491, %v532
        %v541 = vadd.f32 %v492, %v533
        %v542 = vadd.f32 %v493, %v534
        %v543 = vadd.f32 %v494, %v535
        %v544 = vadd.f32 %v495, %v536
        %v545 = vadd.f32 %v496, %v537
        %546 = vset.pattern.permute.xlu0 2
        %547 = vperm.xlu0 %546, %v398
        %v548 = vpop.permute.xlu0 %547
        %550 = vset.pattern.permute.xlu0 2
        %551 = vperm.xlu0 %550, %v399
        %v552 = vpop.permute.xlu0 %551
        %554 = vset.pattern.permute.xlu0 2
        %555 = vperm.xlu0 %554, %v400
        %v556 = vpop.permute.xlu0 %555
        %558 = vset.pattern.permute.xlu0 2
        %559 = vperm.xlu0 %558, %v401
        %v560 = vpop.permute.xlu0 %559
        %562 = vset.pattern.permute.xlu0 2
        %563 = vperm.xlu0 %562, %v402
        %v564 = vpop.permute.xlu0 %563
        %566 = vset.pattern.permute.xlu0 2
        %567 = vperm.xlu0 %566, %v403
        %v568 = vpop.permute.xlu0 %567
        %570 = vset.pattern.permute.xlu0 2
        %571 = vperm.xlu0 %570, %v404
        %v572 = vpop.permute.xlu0 %571
        %574 = vset.pattern.permute.xlu0 2
        %575 = vperm.xlu0 %574, %v405
        %v576 = vpop.permute.xlu0 %575
        %v578 = vperm.slane %v397, 2
        %v579 = vmul.f32 %v548, %v578
        %v580 = vmul.f32 %v552, %v578
        %v581 = vmul.f32 %v556, %v578
        %v582 = vmul.f32 %v560, %v578
        %v583 = vmul.f32 %v564, %v578
        %v584 = vmul.f32 %v568, %v578
        %v585 = vmul.f32 %v572, %v578
        %v586 = vmul.f32 %v576, %v578
        %v587 = vadd.f32 %v538, %v579
        %v588 = vadd.f32 %v539, %v580
        %v589 = vadd.f32 %v540, %v581
        %v590 = vadd.f32 %v541, %v582
        %v591 = vadd.f32 %v542, %v583
        %v592 = vadd.f32 %v543, %v584
        %v593 = vadd.f32 %v544, %v585
        %v594 = vadd.f32 %v545, %v586
        %v595 = vmul.f32 %v587, 2.0
        %v596 = vmul.f32 %v588, 2.0
        %v597 = vmul.f32 %v589, 2.0
        %v598 = vmul.f32 %v590, 2.0
        %v599 = vmul.f32 %v591, 2.0
        %v600 = vmul.f32 %v592, 2.0
        %v601 = vmul.f32 %v593, 2.0
        %v602 = vmul.f32 %v594, 2.0
        %v603 = vsub.f32 %v426, %v595
        %v604 = vsub.f32 %v429, %v596
        %v605 = vsub.f32 %v432, %v597
        %v606 = vsub.f32 %v435, %v598
        %v607 = vsub.f32 %v438, %v599
        %v608 = vsub.f32 %v441, %v600
        %v609 = vsub.f32 %v444, %v601
        %v610 = vsub.f32 %v447, %v602
        %v611 = vlaneseq
        %v612 = vshrl.u32 %v611, 7
        %v613 = vadd.s32 %v612, 8
        %v614 = vadd.s32 %v612, 16
        %v615 = vadd.s32 %v612, 24
        %v616 = vadd.s32 %v612, 32
        %v617 = vadd.s32 %v612, 40
        %v618 = vadd.s32 %v612, 48
        %v619 = vadd.s32 %v612, 56
        %v620 = vmin.f32 %v603, %v607
        %v621 = vmin.f32 %v604, %v608
        %v622 = vmin.f32 %v605, %v609
        %v623 = vmin.f32 %v606, %v610
        %v624 = vmin.f32 %v620, %v621
        %v625 = vmin.f32 %v622, %v623
        %v626 = vmin.f32 %v624, %v625
        %v627 = vrot.slane %v626, 4
        %v628 = vmin.f32 %v626, %v627
        %v629 = vrot.slane %v628, 2
        %v630 = vmin.f32 %v628, %v629
        %v631 = vrot.slane %v630, 1
        %v632 = vmin.f32 %v630, %v631
        %vm633 = vcmp.eq.f32.partialorder %v603, %v632
        %vm634 = vcmp.eq.f32.partialorder %v604, %v632
        %vm635 = vcmp.eq.f32.partialorder %v605, %v632
        %vm636 = vcmp.eq.f32.partialorder %v606, %v632
        %vm637 = vcmp.eq.f32.partialorder %v607, %v632
        %vm638 = vcmp.eq.f32.partialorder %v608, %v632
        %vm639 = vcmp.eq.f32.partialorder %v609, %v632
        %vm640 = vcmp.eq.f32.partialorder %v610, %v632
        %v641 = vsel %vm633, %v612, 64
        %v642 = vsel %vm634, %v613, 64
        %v643 = vsel %vm635, %v614, 64
        %v644 = vsel %vm636, %v615, 64
        %v645 = vsel %vm637, %v616, 64
        %v646 = vsel %vm638, %v617, 64
        %v647 = vsel %vm639, %v618, 64
        %v648 = vsel %vm640, %v619, 64
        %vm649 = vcmp.lt.s32.totalorder %v641, %v645
        %v650 = vsel %vm649, %v641, %v645
        %vm651 = vcmp.lt.s32.totalorder %v642, %v646
        %v652 = vsel %vm651, %v642, %v646
        %vm653 = vcmp.lt.s32.totalorder %v643, %v647
        %v654 = vsel %vm653, %v643, %v647
        %vm655 = vcmp.lt.s32.totalorder %v644, %v648
        %v656 = vsel %vm655, %v644, %v648
        %vm657 = vcmp.lt.s32.totalorder %v650, %v652
        %v658 = vsel %vm657, %v650, %v652
        %vm659 = vcmp.lt.s32.totalorder %v654, %v656
        %v660 = vsel %vm659, %v654, %v656
        %vm661 = vcmp.lt.s32.totalorder %v658, %v660
        %v662 = vsel %vm661, %v658, %v660
        %v663 = vrot.slane %v662, 4
        %vm664 = vcmp.lt.s32.totalorder %v662, %v663
        %v665 = vsel %vm664, %v662, %v663
        %v666 = vrot.slane %v665, 2
        %vm667 = vcmp.lt.s32.totalorder %v665, %v666
        %v668 = vsel %vm667, %v665, %v666
        %v669 = vrot.slane %v668, 1
        %vm670 = vcmp.lt.s32.totalorder %v668, %v669
        %v671 = vsel %vm670, %v668, %v669
        %vm672 = vcmp.eq.s32.totalorder %v612, %v671
        %vm673 = vcmp.eq.s32.totalorder %v613, %v671
        %vm674 = vcmp.eq.s32.totalorder %v614, %v671
        %vm675 = vcmp.eq.s32.totalorder %v615, %v671
        %vm676 = vcmp.eq.s32.totalorder %v616, %v671
        %vm677 = vcmp.eq.s32.totalorder %v617, %v671
        %vm678 = vcmp.eq.s32.totalorder %v618, %v671
        %vm679 = vcmp.eq.s32.totalorder %v619, %v671
        %v680 = vadd.f32 %v632, %v414
        %v681 = vmax.f32 %v680, 0.0
        %v682 = vrsqrt.pop %v681
        %v683 = vmul.f32 %v682, %v681
        %v684 = vmul.f32 %v683, %v682
        %v685 = vmul.f32 0.5, %v684
        %v686 = vsub.f32 1.5, %v685
        %v687 = vmul.f32 %v682, %v686
        %v688 = vmul.f32 %v681, %v687
        %vm689 = vcmp.eq.f32.partialorder %v681, inf
        %v690 = vsel %vm689, %v681, %v688
        %vm691 = vcmp.eq.f32.partialorder %v681, 0.0
        %v692 = vand.u32 %v681, 2147483648
        %v693 = vsel %vm691, %v692, %v690
        %v694 = vadd.f32 %v693, 1e-08
        %v695 = vrcp.pop %v694
        %v696 = vmul.f32 %v694, %v695
        %v697 = vsub.f32 1.0, %v696
        %v698 = vmul.f32 %v695, %v697
        %v699 = vadd.f32 %v695, %v698
        %vm700 = vweird.f32 %v694
        %vm701 = vweird.f32 %v695
        %vm702 = vmor %vm700, %vm701
        %v703 = vsel %vm702, %v695, %v699
        %v704 = vand.u32 2147483647, %v694
        %vm705 = vcmp.eq.f32.partialorder %v704, 8.507059e+37
        %v706 = vand.u32 %v694, 2147483648
        %v707 = vor.u32 1.1754944e-38, %v706
        %v708 = vsel %vm705, %v707, %v703
        %v709 = vmul.f32 1.0, %v708
        %v710 = vsel %vm672, 1e+30, %v603
        %v711 = vsel %vm673, 1e+30, %v604
        %v712 = vsel %vm674, 1e+30, %v605
        %v713 = vsel %vm675, 1e+30, %v606
        %v714 = vsel %vm676, 1e+30, %v607
        %v715 = vsel %vm677, 1e+30, %v608
        %v716 = vsel %vm678, 1e+30, %v609
        %v717 = vsel %vm679, 1e+30, %v610
        %v718 = vmin.f32 %v710, %v714
        %v719 = vmin.f32 %v711, %v715
        %v720 = vmin.f32 %v712, %v716
        %v721 = vmin.f32 %v713, %v717
        %v722 = vmin.f32 %v718, %v719
        %v723 = vmin.f32 %v720, %v721
        %v724 = vmin.f32 %v722, %v723
        %v725 = vrot.slane %v724, 4
        %v726 = vmin.f32 %v724, %v725
        %v727 = vrot.slane %v726, 2
        %v728 = vmin.f32 %v726, %v727
        %v729 = vrot.slane %v728, 1
        %v730 = vmin.f32 %v728, %v729
        %vm731 = vcmp.eq.f32.partialorder %v710, %v730
        %vm732 = vcmp.eq.f32.partialorder %v711, %v730
        %vm733 = vcmp.eq.f32.partialorder %v712, %v730
        %vm734 = vcmp.eq.f32.partialorder %v713, %v730
        %vm735 = vcmp.eq.f32.partialorder %v714, %v730
        %vm736 = vcmp.eq.f32.partialorder %v715, %v730
        %vm737 = vcmp.eq.f32.partialorder %v716, %v730
        %vm738 = vcmp.eq.f32.partialorder %v717, %v730
        %v739 = vsel %vm731, %v612, 64
        %v740 = vsel %vm732, %v613, 64
        %v741 = vsel %vm733, %v614, 64
        %v742 = vsel %vm734, %v615, 64
        %v743 = vsel %vm735, %v616, 64
        %v744 = vsel %vm736, %v617, 64
        %v745 = vsel %vm737, %v618, 64
        %v746 = vsel %vm738, %v619, 64
        %vm747 = vcmp.lt.s32.totalorder %v739, %v743
        %v748 = vsel %vm747, %v739, %v743
        %vm749 = vcmp.lt.s32.totalorder %v740, %v744
        %v750 = vsel %vm749, %v740, %v744
        %vm751 = vcmp.lt.s32.totalorder %v741, %v745
        %v752 = vsel %vm751, %v741, %v745
        %vm753 = vcmp.lt.s32.totalorder %v742, %v746
        %v754 = vsel %vm753, %v742, %v746
        %vm755 = vcmp.lt.s32.totalorder %v748, %v750
        %v756 = vsel %vm755, %v748, %v750
        %vm757 = vcmp.lt.s32.totalorder %v752, %v754
        %v758 = vsel %vm757, %v752, %v754
        %vm759 = vcmp.lt.s32.totalorder %v756, %v758
        %v760 = vsel %vm759, %v756, %v758
        %v761 = vrot.slane %v760, 4
        %vm762 = vcmp.lt.s32.totalorder %v760, %v761
        %v763 = vsel %vm762, %v760, %v761
        %v764 = vrot.slane %v763, 2
        %vm765 = vcmp.lt.s32.totalorder %v763, %v764
        %v766 = vsel %vm765, %v763, %v764
        %v767 = vrot.slane %v766, 1
        %vm768 = vcmp.lt.s32.totalorder %v766, %v767
        %v769 = vsel %vm768, %v766, %v767
        %vm770 = vcmp.eq.s32.totalorder %v612, %v769
        %vm771 = vcmp.eq.s32.totalorder %v613, %v769
        %vm772 = vcmp.eq.s32.totalorder %v614, %v769
        %vm773 = vcmp.eq.s32.totalorder %v615, %v769
        %vm774 = vcmp.eq.s32.totalorder %v616, %v769
        %vm775 = vcmp.eq.s32.totalorder %v617, %v769
        %vm776 = vcmp.eq.s32.totalorder %v618, %v769
        %vm777 = vcmp.eq.s32.totalorder %v619, %v769
        %v778 = vadd.f32 %v730, %v414
        %v779 = vmax.f32 %v778, 0.0
        %v780 = vrsqrt.pop %v779
        %v781 = vmul.f32 %v780, %v779
        %v782 = vmul.f32 %v781, %v780
        %v783 = vmul.f32 0.5, %v782
        %v784 = vsub.f32 1.5, %v783
        %v785 = vmul.f32 %v780, %v784
        %v786 = vmul.f32 %v779, %v785
        %vm787 = vcmp.eq.f32.partialorder %v779, inf
        %v788 = vsel %vm787, %v779, %v786
        %vm789 = vcmp.eq.f32.partialorder %v779, 0.0
        %v790 = vand.u32 %v779, 2147483648
        %v791 = vsel %vm789, %v790, %v788
        %v792 = vadd.f32 %v791, 1e-08
        %v793 = vrcp.pop %v792
        %v794 = vmul.f32 %v792, %v793
        %v795 = vsub.f32 1.0, %v794
        %v796 = vmul.f32 %v793, %v795
        %v797 = vadd.f32 %v793, %v796
        %vm798 = vweird.f32 %v792
        %vm799 = vweird.f32 %v793
        %vm800 = vmor %vm798, %vm799
        %v801 = vsel %vm800, %v793, %v797
        %v802 = vand.u32 2147483647, %v792
        %vm803 = vcmp.eq.f32.partialorder %v802, 8.507059e+37
        %v804 = vand.u32 %v792, 2147483648
        %v805 = vor.u32 1.1754944e-38, %v804
        %v806 = vsel %vm803, %v805, %v801
        %v807 = vmul.f32 1.0, %v806
        %v808 = vsel %vm770, 1e+30, %v710
        %v809 = vsel %vm771, 1e+30, %v711
        %v810 = vsel %vm772, 1e+30, %v712
        %v811 = vsel %vm773, 1e+30, %v713
        %v812 = vsel %vm774, 1e+30, %v714
        %v813 = vsel %vm775, 1e+30, %v715
        %v814 = vsel %vm776, 1e+30, %v716
        %v815 = vsel %vm777, 1e+30, %v717
        %v816 = vmin.f32 %v808, %v812
        %v817 = vmin.f32 %v809, %v813
        %v818 = vmin.f32 %v810, %v814
        %v819 = vmin.f32 %v811, %v815
        %v820 = vmin.f32 %v816, %v817
        %v821 = vmin.f32 %v818, %v819
        %v822 = vmin.f32 %v820, %v821
        %v823 = vrot.slane %v822, 4
        %v824 = vmin.f32 %v822, %v823
        %v825 = vrot.slane %v824, 2
        %v826 = vmin.f32 %v824, %v825
        %v827 = vrot.slane %v826, 1
        %v828 = vmin.f32 %v826, %v827
        %vm829 = vcmp.eq.f32.partialorder %v808, %v828
        %vm830 = vcmp.eq.f32.partialorder %v809, %v828
        %vm831 = vcmp.eq.f32.partialorder %v810, %v828
        %vm832 = vcmp.eq.f32.partialorder %v811, %v828
        %vm833 = vcmp.eq.f32.partialorder %v812, %v828
        %vm834 = vcmp.eq.f32.partialorder %v813, %v828
        %vm835 = vcmp.eq.f32.partialorder %v814, %v828
        %vm836 = vcmp.eq.f32.partialorder %v815, %v828
        %v837 = vsel %vm829, %v612, 64
        %v838 = vsel %vm830, %v613, 64
        %v839 = vsel %vm831, %v614, 64
        %v840 = vsel %vm832, %v615, 64
        %v841 = vsel %vm833, %v616, 64
        %v842 = vsel %vm834, %v617, 64
        %v843 = vsel %vm835, %v618, 64
        %v844 = vsel %vm836, %v619, 64
        %vm845 = vcmp.lt.s32.totalorder %v837, %v841
        %v846 = vsel %vm845, %v837, %v841
        %vm847 = vcmp.lt.s32.totalorder %v838, %v842
        %v848 = vsel %vm847, %v838, %v842
        %vm849 = vcmp.lt.s32.totalorder %v839, %v843
        %v850 = vsel %vm849, %v839, %v843
        %vm851 = vcmp.lt.s32.totalorder %v840, %v844
        %v852 = vsel %vm851, %v840, %v844
        %vm853 = vcmp.lt.s32.totalorder %v846, %v848
        %v854 = vsel %vm853, %v846, %v848
        %vm855 = vcmp.lt.s32.totalorder %v850, %v852
        %v856 = vsel %vm855, %v850, %v852
        %vm857 = vcmp.lt.s32.totalorder %v854, %v856
        %v858 = vsel %vm857, %v854, %v856
        %v859 = vrot.slane %v858, 4
        %vm860 = vcmp.lt.s32.totalorder %v858, %v859
        %v861 = vsel %vm860, %v858, %v859
        %v862 = vrot.slane %v861, 2
        %vm863 = vcmp.lt.s32.totalorder %v861, %v862
        %v864 = vsel %vm863, %v861, %v862
        %v865 = vrot.slane %v864, 1
        %vm866 = vcmp.lt.s32.totalorder %v864, %v865
        %v867 = vsel %vm866, %v864, %v865
        %vm868 = vcmp.eq.s32.totalorder %v612, %v867
        %vm869 = vcmp.eq.s32.totalorder %v613, %v867
        %vm870 = vcmp.eq.s32.totalorder %v614, %v867
        %vm871 = vcmp.eq.s32.totalorder %v615, %v867
        %vm872 = vcmp.eq.s32.totalorder %v616, %v867
        %vm873 = vcmp.eq.s32.totalorder %v617, %v867
        %vm874 = vcmp.eq.s32.totalorder %v618, %v867
        %vm875 = vcmp.eq.s32.totalorder %v619, %v867
        %v876 = vadd.f32 %v828, %v414
        %v877 = vmax.f32 %v876, 0.0
        %v878 = vrsqrt.pop %v877
        %v879 = vmul.f32 %v878, %v877
        %v880 = vmul.f32 %v879, %v878
        %v881 = vmul.f32 0.5, %v880
        %v882 = vsub.f32 1.5, %v881
        %v883 = vmul.f32 %v878, %v882
        %v884 = vmul.f32 %v877, %v883
        %vm885 = vcmp.eq.f32.partialorder %v877, inf
        %v886 = vsel %vm885, %v877, %v884
        %vm887 = vcmp.eq.f32.partialorder %v877, 0.0
        %v888 = vand.u32 %v877, 2147483648
        %v889 = vsel %vm887, %v888, %v886
        %v890 = vadd.f32 %v889, 1e-08
        %v891 = vrcp.pop %v890
        %v892 = vmul.f32 %v890, %v891
        %v893 = vsub.f32 1.0, %v892
        %v894 = vmul.f32 %v891, %v893
        %v895 = vadd.f32 %v891, %v894
        %vm896 = vweird.f32 %v890
        %vm897 = vweird.f32 %v891
        %vm898 = vmor %vm896, %vm897
        %v899 = vsel %vm898, %v891, %v895
        %v900 = vand.u32 2147483647, %v890
        %vm901 = vcmp.eq.f32.partialorder %v900, 8.507059e+37
        %v902 = vand.u32 %v890, 2147483648
        %v903 = vor.u32 1.1754944e-38, %v902
        %v904 = vsel %vm901, %v903, %v899
        %v905 = vmul.f32 1.0, %v904
        %v906 = vadd.f32 %v709, %v807
        %v907 = vadd.f32 %v906, %v905
        %v908 = vrcp.pop %v907
        %v909 = vmul.f32 %v907, %v908
        %v910 = vsub.f32 1.0, %v909
        %v911 = vmul.f32 %v908, %v910
        %v912 = vadd.f32 %v908, %v911
        %vm913 = vweird.f32 %v907
        %vm914 = vweird.f32 %v908
        %vm915 = vmor %vm913, %vm914
        %v916 = vsel %vm915, %v908, %v912
        %v917 = vand.u32 2147483647, %v907
        %vm918 = vcmp.eq.f32.partialorder %v917, 8.507059e+37
        %v919 = vand.u32 %v907, 2147483648
        %v920 = vor.u32 1.1754944e-38, %v919
        %v921 = vsel %vm918, %v920, %v916
        %v922 = vmul.f32 1.0, %v921
        %v923 = vmul.f32 %v709, %v922
        %v924 = vsel %vm672, %v923, 0.0
        %v925 = vsel %vm673, %v923, 0.0
        %v926 = vsel %vm674, %v923, 0.0
        %v927 = vsel %vm675, %v923, 0.0
        %v928 = vsel %vm676, %v923, 0.0
        %v929 = vsel %vm677, %v923, 0.0
        %v930 = vsel %vm678, %v923, 0.0
        %v931 = vsel %vm679, %v923, 0.0
        %v932 = vmul.f32 %v807, %v922
        %v933 = vsel %vm770, %v932, 0.0
        %v934 = vsel %vm771, %v932, 0.0
        %v935 = vsel %vm772, %v932, 0.0
        %v936 = vsel %vm773, %v932, 0.0
        %v937 = vsel %vm774, %v932, 0.0
        %v938 = vsel %vm775, %v932, 0.0
        %v939 = vsel %vm776, %v932, 0.0
        %v940 = vsel %vm777, %v932, 0.0
        %v941 = vadd.f32 %v924, %v933
        %v942 = vadd.f32 %v925, %v934
        %v943 = vadd.f32 %v926, %v935
        %v944 = vadd.f32 %v927, %v936
        %v945 = vadd.f32 %v928, %v937
        %v946 = vadd.f32 %v929, %v938
        %v947 = vadd.f32 %v930, %v939
        %v948 = vadd.f32 %v931, %v940
        %v949 = vmul.f32 %v905, %v922
        %v950 = vsel %vm868, %v949, 0.0
        %v951 = vsel %vm869, %v949, 0.0
        %v952 = vsel %vm870, %v949, 0.0
        %v953 = vsel %vm871, %v949, 0.0
        %v954 = vsel %vm872, %v949, 0.0
        %v955 = vsel %vm873, %v949, 0.0
        %v956 = vsel %vm874, %v949, 0.0
        %v957 = vsel %vm875, %v949, 0.0
        %v958 = vadd.f32 %v941, %v950
        %v959 = vadd.f32 %v942, %v951
        %v960 = vadd.f32 %v943, %v952
        %v961 = vadd.f32 %v944, %v953
        %v962 = vadd.f32 %v945, %v954
        %v963 = vadd.f32 %v946, %v955
        %v964 = vadd.f32 %v947, %v956
        %v965 = vadd.f32 %v948, %v957
        %v966 = vld [vmem:[%s396] sm:$0xff]
        %v967 = vld [vmem:[%s396 + $0x8] sm:$0xff]
        %v968 = vld [vmem:[%s396 + $0x10] sm:$0xff]
        %v969 = vld [vmem:[%s396 + $0x18] sm:$0xff]
        %vm970 = vcmask 523264
        %v972 = vsel %vm970, %v966, 0
        %v975 = vsel %vm970, %v967, 0
        %v978 = vsel %vm970, %v968, 0
        %v981 = vsel %vm970, %v969, 0
        %983 = vmatpush.msra.mxu0 0.0
        %984 = vmatpush.msra.mxu0 0.0
        %985 = vmatpush.msra.mxu0 0.0
        %986 = vmatpush.msra.mxu0 0.0
        %987 = vmatpush.msra.mxu0 0.0
        %988 = vmatpush.msra.mxu0 0.0
        %989 = vmatpush.msra.mxu0 0.0
        %990 = vmatpush.msra.mxu0 0.0
        %991 = vmatpush.msra.mxu0 %v965
        %992 = vmatpush.msra.mxu0 %v964
        %993 = vmatpush.msra.mxu0 %v963
        %994 = vmatpush.msra.mxu0 %v962
        %995 = vmatpush.msra.mxu0 %v961
        %996 = vmatpush.msra.mxu0 %v960
        %997 = vmatpush.msra.mxu0 %v959
        %998 = vmatpush.msra.mxu0 %v958
        %999 = vmatmul.f32.gmra.mxu0 %v972
        %v1000 = vpop.f32.mrf.mxu0
        %v1001 = vadd.f32 0.0, %v1000
        %1002 = vmatmul.f32.gmra.mxu0 %v975
        %v1003 = vpop.f32.mrf.mxu0
        %v1004 = vadd.f32 0.0, %v1003
        %1005 = vmatmul.f32.gmra.mxu0 %v978
        %v1006 = vpop.f32.mrf.mxu0
        %v1007 = vadd.f32 0.0, %v1006
        %1008 = vmatmul.f32.gmra.mxu0 %v981
        %v1009 = vpop.f32.mrf.mxu0
        %v1010 = vadd.f32 0.0, %v1009
        %1011 = vdwg.mxu0
        %1012 = vst [vmem:[#allocation2] sm:$0xff] %v1001
        %1013 = vst [vmem:[#allocation2 + $0x8] sm:$0xff] %v1004
        %1014 = vst [vmem:[#allocation2 + $0x10] sm:$0xff] %v1007
        %1015 = vst [vmem:[#allocation2 + $0x18] sm:$0xff] %v1010
        %v1016 = vld [vmem:[%s391] sm:$0xff]
        %v1017 = vld [vmem:[%s391 + $0x8] sm:$0xff]
        %1018 = vst [vmem:[#allocation2 + $0x20] sm:$0xff] %v1016
        %1019 = vst [vmem:[#allocation2 + $0x28] sm:$0xff] %v1017
        %v1020 = vld [vmem:[#allocation2] sm:$0xff]
        %v1021 = vld [vmem:[#allocation2 + $0x8] sm:$0xff]
        %v1022 = vld [vmem:[#allocation2 + $0x10] sm:$0xff]
        %v1023 = vld [vmem:[#allocation2 + $0x18] sm:$0xff]
        %v1024 = vld [vmem:[#allocation2 + $0x20] sm:$0xff]
        %v1025 = vld [vmem:[#allocation2 + $0x28] sm:$0xff]
        %v1026 = vld [vmem:[%s4] sm:$0xff]
        %v1027 = vld [vmem:[%s4 + $0x8] sm:$0xff]
        %v1028 = vld [vmem:[%s4 + $0x10] sm:$0xff]
        %v1029 = vld [vmem:[%s4 + $0x18] sm:$0xff]
        %v1030 = vld [vmem:[%s4 + $0x20] sm:$0xff]
        %v1031 = vld [vmem:[%s4 + $0x28] sm:$0xff]
        %v1032 = vld [vmem:[%s4 + $0x30] sm:$0xff]
        %v1033 = vld [vmem:[%s4 + $0x38] sm:$0xff]
        %v1034 = vld [vmem:[%s5] sm:$0xff]
        %v1035 = vld [vmem:[%s5 + $0x8] sm:$0xff]
        %v1036 = vld [vmem:[%s5 + $0x10] sm:$0xff]
        %v1037 = vld [vmem:[%s5 + $0x18] sm:$0xff]
        %v1038 = vld [vmem:[%s5 + $0x20] sm:$0xff]
        %v1039 = vld [vmem:[%s5 + $0x28] sm:$0xff]
        %v1040 = vld [vmem:[%s5 + $0x30] sm:$0xff]
        %v1041 = vld [vmem:[%s5 + $0x38] sm:$0xff]
        %vm1042 = vcmask 392192
        %v1044 = vsel %vm1042, %v1026, 0
        %v1047 = vsel %vm1042, %v1027, 0
        %v1050 = vsel %vm1042, %v1028, 0
        %v1053 = vsel %vm1042, %v1029, 0
        %v1056 = vsel %vm1042, %v1030, 0
        %v1059 = vsel %vm1042, %v1031, 0
        %v1062 = vsel %vm1042, %v1032, 0
        %v1065 = vsel %vm1042, %v1033, 0
        %1067 = vmatpush.msra.mxu0 0.0
        %1068 = vmatpush.msra.mxu0 0.0
        %1069 = vmatpush.msra.mxu0 0.0
        %1070 = vmatpush.msra.mxu0 0.0
        %1071 = vmatpush.msra.mxu0 0.0
        %1072 = vmatpush.msra.mxu0 0.0
        %1073 = vmatpush.msra.mxu0 0.0
        %1074 = vmatpush.msra.mxu0 0.0
        %1075 = vmatpush.msra.mxu0 0.0
        %1076 = vmatpush.msra.mxu0 0.0
        %1077 = vmatpush.msra.mxu0 %v1025
        %1078 = vmatpush.msra.mxu0 %v1024
        %1079 = vmatpush.msra.mxu0 %v1023
        %1080 = vmatpush.msra.mxu0 %v1022
        %1081 = vmatpush.msra.mxu0 %v1021
        %1082 = vmatpush.msra.mxu0 %v1020
        %1083 = vmatmul.f32.gmra.mxu0 %v1044
        %v1084 = vpop.f32.mrf.mxu0
        %v1085 = vadd.f32 0.0, %v1084
        %1086 = vmatmul.f32.gmra.mxu0 %v1047
        %v1087 = vpop.f32.mrf.mxu0
        %v1088 = vadd.f32 0.0, %v1087
        %1089 = vmatmul.f32.gmra.mxu0 %v1050
        %v1090 = vpop.f32.mrf.mxu0
        %v1091 = vadd.f32 0.0, %v1090
        %1092 = vmatmul.f32.gmra.mxu0 %v1053
        %v1093 = vpop.f32.mrf.mxu0
        %v1094 = vadd.f32 0.0, %v1093
        %1095 = vmatmul.f32.gmra.mxu0 %v1056
        %v1096 = vpop.f32.mrf.mxu0
        %v1097 = vadd.f32 0.0, %v1096
        %1098 = vmatmul.f32.gmra.mxu0 %v1059
        %v1099 = vpop.f32.mrf.mxu0
        %v1100 = vadd.f32 0.0, %v1099
        %1101 = vmatmul.f32.gmra.mxu0 %v1062
        %v1102 = vpop.f32.mrf.mxu0
        %v1103 = vadd.f32 0.0, %v1102
        %1104 = vmatmul.f32.gmra.mxu0 %v1065
        %v1105 = vpop.f32.mrf.mxu0
        %v1106 = vadd.f32 0.0, %v1105
        %1107 = vdwg.mxu0
        %1109 = vset.pattern.permute.xlu0 0
        %1110 = vperm.xlu0 %1109, %v1034
        %v1111 = vpop.permute.xlu0 %1110
        %1114 = vset.pattern.permute.xlu0 0
        %1115 = vperm.xlu0 %1114, %v1035
        %v1116 = vpop.permute.xlu0 %1115
        %1119 = vset.pattern.permute.xlu0 0
        %1120 = vperm.xlu0 %1119, %v1036
        %v1121 = vpop.permute.xlu0 %1120
        %1124 = vset.pattern.permute.xlu0 0
        %1125 = vperm.xlu0 %1124, %v1037
        %v1126 = vpop.permute.xlu0 %1125
        %1129 = vset.pattern.permute.xlu0 0
        %1130 = vperm.xlu0 %1129, %v1038
        %v1131 = vpop.permute.xlu0 %1130
        %1134 = vset.pattern.permute.xlu0 0
        %1135 = vperm.xlu0 %1134, %v1039
        %v1136 = vpop.permute.xlu0 %1135
        %1139 = vset.pattern.permute.xlu0 0
        %1140 = vperm.xlu0 %1139, %v1040
        %v1141 = vpop.permute.xlu0 %1140
        %1144 = vset.pattern.permute.xlu0 0
        %1145 = vperm.xlu0 %1144, %v1041
        %v1146 = vpop.permute.xlu0 %1145
        %v1148 = vmul.f32 %v1085, %v1111
        %v1149 = vmul.f32 %v1088, %v1116
        %v1150 = vmul.f32 %v1091, %v1121
        %v1151 = vmul.f32 %v1094, %v1126
        %v1152 = vmul.f32 %v1097, %v1131
        %v1153 = vmul.f32 %v1100, %v1136
        %v1154 = vmul.f32 %v1103, %v1141
        %v1155 = vmul.f32 %v1106, %v1146
        %1156 = vset.pattern.permute.xlu0 1
        %1157 = vperm.xlu0 %1156, %v1034
        %v1158 = vpop.permute.xlu0 %1157
        %1160 = vset.pattern.permute.xlu0 1
        %1161 = vperm.xlu0 %1160, %v1035
        %v1162 = vpop.permute.xlu0 %1161
        %1164 = vset.pattern.permute.xlu0 1
        %1165 = vperm.xlu0 %1164, %v1036
        %v1166 = vpop.permute.xlu0 %1165
        %1168 = vset.pattern.permute.xlu0 1
        %1169 = vperm.xlu0 %1168, %v1037
        %v1170 = vpop.permute.xlu0 %1169
        %1172 = vset.pattern.permute.xlu0 1
        %1173 = vperm.xlu0 %1172, %v1038
        %v1174 = vpop.permute.xlu0 %1173
        %1176 = vset.pattern.permute.xlu0 1
        %1177 = vperm.xlu0 %1176, %v1039
        %v1178 = vpop.permute.xlu0 %1177
        %1180 = vset.pattern.permute.xlu0 1
        %1181 = vperm.xlu0 %1180, %v1040
        %v1182 = vpop.permute.xlu0 %1181
        %1184 = vset.pattern.permute.xlu0 1
        %1185 = vperm.xlu0 %1184, %v1041
        %v1186 = vpop.permute.xlu0 %1185
        %v1188 = vadd.f32 %v1148, %v1158
        %v1189 = vadd.f32 %v1149, %v1162
        %v1190 = vadd.f32 %v1150, %v1166
        %v1191 = vadd.f32 %v1151, %v1170
        %v1192 = vadd.f32 %v1152, %v1174
        %v1193 = vadd.f32 %v1153, %v1178
        %v1194 = vadd.f32 %v1154, %v1182
        %v1195 = vadd.f32 %v1155, %v1186
        %v1196 = vmax.f32 %v1188, 0.0
        %v1197 = vmax.f32 %v1189, 0.0
        %v1198 = vmax.f32 %v1190, 0.0
        %v1199 = vmax.f32 %v1191, 0.0
        %v1200 = vmax.f32 %v1192, 0.0
        %v1201 = vmax.f32 %v1193, 0.0
        %v1202 = vmax.f32 %v1194, 0.0
        %v1203 = vmax.f32 %v1195, 0.0
        %v1204 = vld [vmem:[%s6] sm:$0xff]
        %v1205 = vld [vmem:[%s6 + $0x8] sm:$0xff]
        %v1206 = vld [vmem:[%s6 + $0x10] sm:$0xff]
        %v1207 = vld [vmem:[%s6 + $0x18] sm:$0xff]
        %v1208 = vld [vmem:[%s6 + $0x20] sm:$0xff]
        %v1209 = vld [vmem:[%s6 + $0x28] sm:$0xff]
        %v1210 = vld [vmem:[%s6 + $0x30] sm:$0xff]
        %v1211 = vld [vmem:[%s6 + $0x38] sm:$0xff]
        %v1212 = vld [vmem:[%s7] sm:$0xff]
        %v1213 = vld [vmem:[%s7 + $0x8] sm:$0xff]
        %v1214 = vld [vmem:[%s7 + $0x10] sm:$0xff]
        %v1215 = vld [vmem:[%s7 + $0x18] sm:$0xff]
        %v1216 = vld [vmem:[%s7 + $0x20] sm:$0xff]
        %v1217 = vld [vmem:[%s7 + $0x28] sm:$0xff]
        %v1218 = vld [vmem:[%s7 + $0x30] sm:$0xff]
        %v1219 = vld [vmem:[%s7 + $0x38] sm:$0xff]
        %v1221 = vsel %vm970, %v1204, 0
        %v1224 = vsel %vm970, %v1205, 0
        %v1227 = vsel %vm970, %v1206, 0
        %v1230 = vsel %vm970, %v1207, 0
        %v1233 = vsel %vm970, %v1208, 0
        %v1236 = vsel %vm970, %v1209, 0
        %v1239 = vsel %vm970, %v1210, 0
        %v1242 = vsel %vm970, %v1211, 0
        %1244 = vmatpush.msra.mxu0 0.0
        %1245 = vmatpush.msra.mxu0 0.0
        %1246 = vmatpush.msra.mxu0 0.0
        %1247 = vmatpush.msra.mxu0 0.0
        %1248 = vmatpush.msra.mxu0 0.0
        %1249 = vmatpush.msra.mxu0 0.0
        %1250 = vmatpush.msra.mxu0 0.0
        %1251 = vmatpush.msra.mxu0 0.0
        %1252 = vmatpush.msra.mxu0 %v1203
        %1253 = vmatpush.msra.mxu0 %v1202
        %1254 = vmatpush.msra.mxu0 %v1201
        %1255 = vmatpush.msra.mxu0 %v1200
        %1256 = vmatpush.msra.mxu0 %v1199
        %1257 = vmatpush.msra.mxu0 %v1198
        %1258 = vmatpush.msra.mxu0 %v1197
        %1259 = vmatpush.msra.mxu0 %v1196
        %1260 = vmatmul.f32.gmra.mxu0 %v1221
        %v1261 = vpop.f32.mrf.mxu0
        %v1262 = vadd.f32 0.0, %v1261
        %1263 = vmatmul.f32.gmra.mxu0 %v1224
        %v1264 = vpop.f32.mrf.mxu0
        %v1265 = vadd.f32 0.0, %v1264
        %1266 = vmatmul.f32.gmra.mxu0 %v1227
        %v1267 = vpop.f32.mrf.mxu0
        %v1268 = vadd.f32 0.0, %v1267
        %1269 = vmatmul.f32.gmra.mxu0 %v1230
        %v1270 = vpop.f32.mrf.mxu0
        %v1271 = vadd.f32 0.0, %v1270
        %1272 = vmatmul.f32.gmra.mxu0 %v1233
        %v1273 = vpop.f32.mrf.mxu0
        %v1274 = vadd.f32 0.0, %v1273
        %1275 = vmatmul.f32.gmra.mxu0 %v1236
        %v1276 = vpop.f32.mrf.mxu0
        %v1277 = vadd.f32 0.0, %v1276
        %1278 = vmatmul.f32.gmra.mxu0 %v1239
        %v1279 = vpop.f32.mrf.mxu0
        %v1280 = vadd.f32 0.0, %v1279
        %1281 = vmatmul.f32.gmra.mxu0 %v1242
        %v1282 = vpop.f32.mrf.mxu0
        %v1283 = vadd.f32 0.0, %v1282
        %1284 = vdwg.mxu0
        %1286 = vset.pattern.permute.xlu0 0
        %1287 = vperm.xlu0 %1286, %v1212
        %v1288 = vpop.permute.xlu0 %1287
        %1291 = vset.pattern.permute.xlu0 0
        %1292 = vperm.xlu0 %1291, %v1213
        %v1293 = vpop.permute.xlu0 %1292
        %1296 = vset.pattern.permute.xlu0 0
        %1297 = vperm.xlu0 %1296, %v1214
        %v1298 = vpop.permute.xlu0 %1297
        %1301 = vset.pattern.permute.xlu0 0
        %1302 = vperm.xlu0 %1301, %v1215
        %v1303 = vpop.permute.xlu0 %1302
        %1306 = vset.pattern.permute.xlu0 0
        %1307 = vperm.xlu0 %1306, %v1216
        %v1308 = vpop.permute.xlu0 %1307
        %1311 = vset.pattern.permute.xlu0 0
        %1312 = vperm.xlu0 %1311, %v1217
        %v1313 = vpop.permute.xlu0 %1312
        %1316 = vset.pattern.permute.xlu0 0
        %1317 = vperm.xlu0 %1316, %v1218
        %v1318 = vpop.permute.xlu0 %1317
        %1321 = vset.pattern.permute.xlu0 0
        %1322 = vperm.xlu0 %1321, %v1219
        %v1323 = vpop.permute.xlu0 %1322
        %v1325 = vmul.f32 %v1262, %v1288
        %v1326 = vmul.f32 %v1265, %v1293
        %v1327 = vmul.f32 %v1268, %v1298
        %v1328 = vmul.f32 %v1271, %v1303
        %v1329 = vmul.f32 %v1274, %v1308
        %v1330 = vmul.f32 %v1277, %v1313
        %v1331 = vmul.f32 %v1280, %v1318
        %v1332 = vmul.f32 %v1283, %v1323
        %1333 = vset.pattern.permute.xlu0 1
        %1334 = vperm.xlu0 %1333, %v1212
        %v1335 = vpop.permute.xlu0 %1334
        %1337 = vset.pattern.permute.xlu0 1
        %1338 = vperm.xlu0 %1337, %v1213
        %v1339 = vpop.permute.xlu0 %1338
        %1341 = vset.pattern.permute.xlu0 1
        %1342 = vperm.xlu0 %1341, %v1214
        %v1343 = vpop.permute.xlu0 %1342
        %1345 = vset.pattern.permute.xlu0 1
        %1346 = vperm.xlu0 %1345, %v1215
        %v1347 = vpop.permute.xlu0 %1346
        %1349 = vset.pattern.permute.xlu0 1
        %1350 = vperm.xlu0 %1349, %v1216
        %v1351 = vpop.permute.xlu0 %1350
        %1353 = vset.pattern.permute.xlu0 1
        %1354 = vperm.xlu0 %1353, %v1217
        %v1355 = vpop.permute.xlu0 %1354
        %1357 = vset.pattern.permute.xlu0 1
        %1358 = vperm.xlu0 %1357, %v1218
        %v1359 = vpop.permute.xlu0 %1358
        %1361 = vset.pattern.permute.xlu0 1
        %1362 = vperm.xlu0 %1361, %v1219
        %v1363 = vpop.permute.xlu0 %1362
        %v1365 = vadd.f32 %v1325, %v1335
        %v1366 = vadd.f32 %v1326, %v1339
        %v1367 = vadd.f32 %v1327, %v1343
        %v1368 = vadd.f32 %v1328, %v1347
        %v1369 = vadd.f32 %v1329, %v1351
        %v1370 = vadd.f32 %v1330, %v1355
        %v1371 = vadd.f32 %v1331, %v1359
        %v1372 = vadd.f32 %v1332, %v1363
        %v1373 = vmax.f32 %v1365, 0.0
        %v1374 = vmax.f32 %v1366, 0.0
        %v1375 = vmax.f32 %v1367, 0.0
        %v1376 = vmax.f32 %v1368, 0.0
        %v1377 = vmax.f32 %v1369, 0.0
        %v1378 = vmax.f32 %v1370, 0.0
        %v1379 = vmax.f32 %v1371, 0.0
        %v1380 = vmax.f32 %v1372, 0.0
        %1381 = vst [vmem:[%s371] sm:$0xff] %v1373
        %1382 = vst [vmem:[%s371 + $0x8] sm:$0xff] %v1374
        %1383 = vst [vmem:[%s371 + $0x10] sm:$0xff] %v1375
        %1384 = vst [vmem:[%s371 + $0x18] sm:$0xff] %v1376
        %1385 = vst [vmem:[%s371 + $0x20] sm:$0xff] %v1377
        %1386 = vst [vmem:[%s371 + $0x28] sm:$0xff] %v1378
        %1387 = vst [vmem:[%s371 + $0x30] sm:$0xff] %v1379
        %1388 = vst [vmem:[%s371 + $0x38] sm:$0xff] %v1380
        %s1389 = sand.u32 %s236, 1
        %s1390 = scalar_lea.sflag [#allocation4], %s1389
        %s1391 = sand.u32 %s236, 1
        %s1392 = smul.addr %s1391, 64
        %s1393 = scalar_lea.vmem [#allocation3], %s1392
        // Predicated region
        $region53: #{tpu_custom_call.1} parent=51 // pred_check
          %p1394 = pneg %p246
        $region54: #{tpu_custom_call.1} parent=51 // pred_check_branch
          %1396 = sbr.rel (%p1394) target = $region56
        $region55: #{tpu_custom_call.1} parent=51 // pred_region
          %1398 = vsyncadd %s1390, 0
          %s1399 = smul.addr %s26, 8
          %s1400 = sadd.s32 %s27, %s1399
          %s1401 = smul.addr %s1400, 8
          %s1402 = scalar_lea.hbm %s8, %s1401
          %s1403 = sshll.u32 %s1393, 4
          %s1404 = int_to_ptr.vmem [resolvable:$true] %s1403
          %s1405 = sshll.u32 %s1402, 4
          %s1406 = int_to_ptr.hbm [resolvable:$true] %s1405
          %1411 = dma.vmem_to_hbm [thread:$0]  %s1404, 1024, %s1406, %s1390, 128, 128, 8
        $region56: #{tpu_custom_call.1} parent=51 // pred_fallthru
          _
      $region52: #{tpu_custom_call.1} parent=5 // pred_fallthru
        _
      %p1412 = scmp.le.s32.totalorder 2, %s17
      // Predicated region
      $region57: #{tpu_custom_call.1} parent=5 // pred_check
        %p1413 = pneg %p1412
      $region58: #{tpu_custom_call.1} parent=5 // pred_check_branch
        %1415 = sbr.rel (%p1413) target = $region60
      $region59: #{tpu_custom_call.1} parent=5 // pred_region
        %s1416 = ssub.s32 %s17, 2
        // Predicated region
        $region61: #{tpu_custom_call.1} parent=59 // pred_check
          %p1417 = pneg %p252
        $region62: #{tpu_custom_call.1} parent=59 // pred_check_branch
          %1419 = sbr.rel (%p1417) target = $region64
        $region63: #{tpu_custom_call.1} parent=59 // pred_region
          %s1420 = sand.u32 %s237, 1
          %s1421 = scalar_lea.sflag [#allocation4], %s1420
          %s1422 = sand.u32 %s237, 1
          %s1423 = smul.addr %s1422, 64
          %s1424 = scalar_lea.vmem [#allocation3], %s1423
          %1426 = dma.done %s1421, 1024
        $region64: #{tpu_custom_call.1} parent=59 // pred_fallthru
          _
      $region60: #{tpu_custom_call.1} parent=5 // pred_fallthru
        _
    $region6: #{tpu_custom_call.1} parent=1 // loop_footer
      %s21 = sadd.s32 1, %s17
    $region7: #{tpu_custom_call.1} parent=1 // loop_footer_branch
      %16 = sbr.rel target = $region3
    $region8: #{tpu_custom_call.1} parent=1 // loop_exit
      _
    %1427 = vsyncpa [#allocation4], 1
    %s1428 = scalar_lea.sflag [#allocation4], 1
    %1429 = vsyncpa %s1428, 1

</llo_original>
